<compile_context>
chip_gen: v5e
topology: v5e:2x2
jax: 0.10.0
libtpu: 0.0.40
codegen_flags: <defaults>
</compile_context>

<pallas_src>
import jax
import jax.numpy as jnp
import numpy as np
from jax.experimental import pallas as pl
from jax.experimental.pallas import tpu as pltpu


def dual_attention_kernel(att_ref, h_ref,
                          wa2a_ref,   # (H, A)  att2att weight, pre-transposed
                          wh2a_ref,   # (H, A)  h2att weight, pre-transposed
                          wc2a_ref,   # (A, L)  channel_to_att weight (as-is)
                          vrow_ref,   # (8, A)  rows: b_a2a, b_h2a, w_alpha, b_alpha, b_beta
                          vcol_ref,   # (A, 8)  cols: b_c2a, w_beta
                          out_ref):   # (1, TB, Wpad) packed output slab
    TB, L, H = att_ref.shape
    A = wa2a_ref.shape[1]
    Wpad = out_ref.shape[-1]

    att3 = att_ref[...]                              # (TB, L, H)
    # leading-dim merge is layout-preserving because L % 8 == 0
    att2 = att3.reshape(TB * L, H)
    hblk = h_ref[0]                                  # (TB, H)

    # ---- unpack merged small parameters (tiny masked loads) ----
    b_a2a = vrow_ref[0:1, :]                         # (1, A)
    b_h2a = vrow_ref[1:2, :]                         # (1, A)
    w_alpha = vrow_ref[2:3, :]                       # (1, A)
    b_alpha = vrow_ref[3:4, 0:1]                     # (1, 1)
    b_beta = vrow_ref[4:5, 0:1]                      # (1, 1)
    b_c2a_col = vcol_ref[:, 0:1]                     # (A, 1)
    w_beta_col = vcol_ref[:, 1:2]                    # (A, 1)
    wc2a = wc2a_ref[...]                             # (A, L)

    # ---- shared projections: batch folded into the MXU M dimension ----
    spatial = (jnp.dot(att2, wa2a_ref[...], preferred_element_type=jnp.float32)
               + b_a2a).reshape(TB, L, A)                                          # (TB, L, A)
    p_h = (jnp.dot(hblk, wh2a_ref[...], preferred_element_type=jnp.float32)
           + b_h2a)                                                                # (TB, A)

    # ---- spatial attention: alpha_net as VPU multiply + lane reduce over A ----
    t_sp = jnp.tanh(spatial + p_h[:, None, :])                                     # (TB, L, A)
    sp_logits = jnp.sum(t_sp * w_alpha, axis=-1) + b_alpha                         # (TB, L)
    sp_max = jnp.max(sp_logits, axis=-1, keepdims=True)
    sp_exp = jnp.exp(sp_logits - sp_max)
    w_spatial = sp_exp * (1.0 / jnp.sum(sp_exp, axis=-1, keepdims=True))           # (TB, L)
    weighted_spatial = jnp.sum(w_spatial[:, :, None] * att3, axis=1)               # (TB, H)

    # ---- channel attention: chan[b] = W_c2a @ att[b]  (no weight replication,
    #      no in-kernel transposes; TB static -> unrolled 2-D MXU matmuls) ----
    chan = jnp.stack(
        [jnp.dot(wc2a, att3[b], preferred_element_type=jnp.float32)
         for b in range(TB)], axis=0)                                              # (TB, A, H)
    t_ch = jnp.tanh(chan + b_c2a_col + p_h[:, :, None])                            # (TB, A, H)
    ch_logits = jnp.sum(t_ch * w_beta_col, axis=1) + b_beta                        # (TB, H)
    ch_max = jnp.max(ch_logits, axis=-1, keepdims=True)
    ch_exp = jnp.exp(ch_logits - ch_max)
    w_channel = ch_exp * (1.0 / jnp.sum(ch_exp, axis=-1, keepdims=True))           # (TB, H)
    weighted_channel = jnp.sum(w_channel[:, None, :] * att3, axis=-1)              # (TB, L)

    # ---- single lane-dense store: [spatial | channel | weights | zero pad] ----
    slab = jnp.concatenate([weighted_spatial, weighted_channel, w_spatial], axis=-1)
    pad = Wpad - slab.shape[-1]
    if pad:
        slab = jnp.concatenate([slab, jnp.zeros((TB, pad), slab.dtype)], axis=-1)
    out_ref[0] = slab                                                              # (TB, Wpad)


def _round_up(x, m):
    return -(-x // m) * m


def _pick_batch_block(B, L, min_rows=128):
    """Smallest TB with TB*L >= min_rows (fills the MXU M dim), capped at B.
    v5e: min_rows=128 (128-wide MXU, single TC -> TB=B is also fine).
    v6e/v7x: pass min_rows=256 (256-wide MXU); the batch is padded so awkward B
    never collapses to a single grid step unnecessarily."""
    tb = max(1, -(-min_rows // L))
    return min(tb, B)


def dual_attention(att_features, h, params, *, batch_block=None, mxu_m_rows=128):
    """att_features: (B, S, S, H) or (B, L, H); h: (B, H)."""
    B = att_features.shape[0]
    H = att_features.shape[-1]
    L = att_features.size // B // H                  # "locations", as in the torch code
    att = att_features.reshape(B, L, H).astype(jnp.float32)
    h2 = h.astype(jnp.float32).reshape(B, H)

    A = params["w_att2att"].shape[0]
    TB = batch_block if batch_block is not None else _pick_batch_block(B, L, mxu_m_rows)

    # Pad the batch to a multiple of TB (a few wasted rows beat NB=1 / MXU underfill).
    B_pad = _round_up(B, TB)
    if B_pad != B:
        att = jnp.concatenate([att, jnp.zeros((B_pad - B, L, H), att.dtype)], axis=0)
        h2 = jnp.concatenate([h2, jnp.zeros((B_pad - B, H), h2.dtype)], axis=0)
    NB = B_pad // TB

    f32 = jnp.float32
    # One-time weight re-layout in the wrapper (no per-step transposes in-kernel).
    wa2a_t = params["w_att2att"].T.astype(f32)       # (H, A)
    wh2a_t = params["w_h2att"].T.astype(f32)         # (H, A)
    wc2a = params["w_c2a"].astype(f32)               # (A, L)

    # Merge the 7 tiny params into two packed arrays (fewer DMAs / kernel args).
    vrow = jnp.zeros((8, A), f32)
    vrow = vrow.at[0, :].set(params["b_att2att"].astype(f32))
    vrow = vrow.at[1, :].set(params["b_h2att"].astype(f32))
    vrow = vrow.at[2, :].set(params["w_alpha"].reshape(A).astype(f32))
    vrow = vrow.at[3, 0].set(params["b_alpha"].reshape(()).astype(f32))
    vrow = vrow.at[4, 0].set(params["b_beta"].reshape(()).astype(f32))

    vcol = jnp.zeros((A, 8), f32)
    vcol = vcol.at[:, 0].set(params["b_c2a"].astype(f32))
    vcol = vcol.at[:, 1].set(params["w_beta"].reshape(A).astype(f32))

    h3 = h2.reshape(NB, TB, H)                       # block last-two dims == full array dims

    Wtot = H + 2 * L
    Wpad = _round_up(Wtot, 128)                      # lane-dense, unmasked output store

    def const_spec(shape):
        # grid-invariant block: constant index map + single-buffered pipeline
        return pl.BlockSpec(shape, lambda i: (0, 0), pipeline_mode=pl.Buffered(1))

    grid_spec = pltpu.PrefetchScalarGridSpec(
        num_scalar_prefetch=0,
        grid=(NB,),
        in_specs=[
            pl.BlockSpec((TB, L, H), lambda i: (i, 0, 0)),   # att_features (batch block)
            pl.BlockSpec((1, TB, H), lambda i: (i, 0, 0)),   # h (batch block)
            const_spec((H, A)),                              # W_att2att^T
            const_spec((H, A)),                              # W_h2att^T
            const_spec((A, L)),                              # W_c2a
            const_spec((8, A)),                              # packed row params
            const_spec((A, 8)),                              # packed column params
        ],
        out_specs=pl.BlockSpec((1, TB, Wpad), lambda i: (i, 0, 0)),
    )

    # Explicit VMEM budget: double-buffered blocked operands + single-buffered
    # weights, with headroom for the in-kernel f32 temporaries; capped for v7x.
    weight_bytes = (2 * H * A + A * L + 8 * A + A * 8) * 4
    block_bytes = 2 * (TB * L * H + TB * H + TB * Wpad) * 4
    temp_bytes = (TB * L * A + TB * A * H) * 4
    vmem_limit = int(min(48 * 1024 * 1024,
                         max(16 * 1024 * 1024,
                             4 * (weight_bytes + block_bytes + temp_bytes))))

    cw = pl.pallas_call(
        dual_attention_kernel,
        out_shape=jax.ShapeDtypeStruct((NB, TB, Wpad), jnp.float32),
        grid_spec=grid_spec,
        compiler_params=pltpu.CompilerParams(
            dimension_semantics=("parallel",),
            vmem_limit_bytes=vmem_limit),
    )(att, h3, wa2a_t, wh2a_t, wc2a, vrow, vcol)

    cw = cw.reshape(B_pad, Wpad)[:B]
    weighted_spatial = cw[:, :H]
    weighted_channel = cw[:, H:H + L]
    weights_spatial = cw[:, H + L:H + 2 * L]
    return weighted_spatial, weighted_channel, weights_spatial


def dual_attention_reference(att_features, h, params):
    """Pure-JAX reference mirroring the PyTorch forward."""
    B = att_features.shape[0]
    H = att_features.shape[-1]
    L = att_features.size // B // H
    att = att_features.reshape(B, L, H).astype(jnp.float32)
    h = h.astype(jnp.float32)

    spatial = att @ params["w_att2att"].T + params["b_att2att"]            # (B,L,A)
    att_t = jnp.transpose(att, (0, 2, 1))                                  # (B,H,L)
    channel = att_t @ params["w_c2a"].T + params["b_c2a"]                  # (B,H,A)
    p_h = (h @ params["w_h2att"].T + params["b_h2att"])[:, None, :]        # (B,1,A)

    ws_logits = (jnp.tanh(spatial + p_h) @ params["w_alpha"].T
                 + params["b_alpha"])[..., 0]                              # (B,L)
    ws = jax.nn.softmax(ws_logits, axis=1)
    weighted_sp = jnp.einsum('bl,blh->bh', ws, att)                        # (B,H)

    wc_logits = (jnp.tanh(channel + p_h) @ params["w_beta"].T
                 + params["b_beta"])[..., 0]                               # (B,H)
    wc = jax.nn.softmax(wc_logits, axis=1)
    weighted_ch = jnp.einsum('bh,blh->bl', wc, att)                        # (B,L)
    return weighted_sp, weighted_ch, ws


def make_params(att_hid_size, hidden_size, att_size, key):
    L = att_size * att_size
    keys = jax.random.split(key, 10)
    sc = 0.1
    return {
        "w_att2att": sc * jax.random.normal(keys[0], (att_hid_size, hidden_size), jnp.float32),
        "b_att2att": sc * jax.random.normal(keys[1], (att_hid_size,), jnp.float32),
        "w_h2att":   sc * jax.random.normal(keys[2], (att_hid_size, hidden_size), jnp.float32),
        "b_h2att":   sc * jax.random.normal(keys[3], (att_hid_size,), jnp.float32),
        "w_alpha":   sc * jax.random.normal(keys[4], (1, att_hid_size), jnp.float32),
        "b_alpha":   sc * jax.random.normal(keys[5], (1,), jnp.float32),
        "w_c2a":     sc * jax.random.normal(keys[6], (att_hid_size, L), jnp.float32),
        "b_c2a":     sc * jax.random.normal(keys[7], (att_hid_size,), jnp.float32),
        "w_beta":    sc * jax.random.normal(keys[8], (1, att_hid_size), jnp.float32),
        "b_beta":    sc * jax.random.normal(keys[9], (1,), jnp.float32),
    }


if __name__ == "__main__":
    # Small config: hidden_size = att_hid_size = 32, att_size = 8 -> L = 64 locations.
    # batch = 4 -> TB = 2 (TB*L = 128 MXU rows), NB = 2 parallel grid steps.
    B, H, A, S = 4, 32, 32, 8

    key = jax.random.PRNGKey(0)
    kp, kx, kh = jax.random.split(key, 3)
    params = make_params(att_hid_size=A, hidden_size=H, att_size=S, key=kp)

    att_features = jax.random.normal(kx, (B, S, S, H), jnp.float32)  # encoder feature map
    h = jax.random.normal(kh, (B, H), jnp.float32)                   # decoder hidden state

    sp, ch, ws = dual_attention(att_features, h, params)
    jax.block_until_ready((sp, ch, ws))

    sp_ref, ch_ref, ws_ref = dual_attention_reference(att_features, h, params)

    assert sp.shape == (B, H) and ch.shape == (B, S * S) and ws.shape == (B, S * S)
    np.testing.assert_allclose(np.asarray(sp), np.asarray(sp_ref), rtol=1e-5, atol=1e-5)
    np.testing.assert_allclose(np.asarray(ch), np.asarray(ch_ref), rtol=1e-5, atol=1e-5)
    np.testing.assert_allclose(np.asarray(ws), np.asarray(ws_ref), rtol=1e-5, atol=1e-5)

    print("KERNEL_OK")
</pallas_src>

<mosaic_0001>
module attributes {stable_mosaic.version = 11 : i64} {
  func.func @dual_attention_kernel(%arg0: i32, %arg1: memref<2x64x32xf32, #tpu.memory_space<vmem>>, %arg2: memref<1x2x32xf32, #tpu.memory_space<vmem>>, %arg3: memref<32x32xf32, #tpu.memory_space<vmem>>, %arg4: memref<32x32xf32, #tpu.memory_space<vmem>>, %arg5: memref<32x64xf32, #tpu.memory_space<vmem>>, %arg6: memref<8x32xf32, #tpu.memory_space<vmem>>, %arg7: memref<32x8xf32, #tpu.memory_space<vmem>>, %arg8: memref<1x2x256xf32, #tpu.memory_space<vmem>>) attributes {dimension_semantics = [#tpu.dimension_semantics<parallel>], iteration_bounds = array<i64: 2>, scalar_prefetch = 0 : i64, scratch_operands = 0 : i64, tpu.core_type = #tpu.core_type<tc>, window_params = [{transform_indices = @transform_0, window_bounds = array<i64: 2, 64, 32>}, {transform_indices = @transform_1, window_bounds = array<i64: 1, 2, 32>}, {pipeline_mode = #tpu.pipeline_mode<synchronous>, transform_indices = @transform_2, window_bounds = array<i64: 32, 32>}, {pipeline_mode = #tpu.pipeline_mode<synchronous>, transform_indices = @transform_3, window_bounds = array<i64: 32, 32>}, {pipeline_mode = #tpu.pipeline_mode<synchronous>, transform_indices = @transform_4, window_bounds = array<i64: 32, 64>}, {pipeline_mode = #tpu.pipeline_mode<synchronous>, transform_indices = @transform_5, window_bounds = array<i64: 8, 32>}, {pipeline_mode = #tpu.pipeline_mode<synchronous>, transform_indices = @transform_6, window_bounds = array<i64: 32, 8>}, {transform_indices = @transform_7, window_bounds = array<i64: 1, 2, 256>}]} {
    %c0 = arith.constant 0 : index
    %c0_0 = arith.constant 0 : index
    %c0_1 = arith.constant 0 : index
    %0 = vector.load %arg1[%c0, %c0_0, %c0_1] : memref<2x64x32xf32, #tpu.memory_space<vmem>>, vector<2x64x32xf32>
    %1 = vector.shape_cast %0 : vector<2x64x32xf32> to vector<128x32xf32>
    %c0_2 = arith.constant 0 : index
    %c0_3 = arith.constant 0 : index
    %c0_4 = arith.constant 0 : index
    %2 = vector.load %arg2[%c0_2, %c0_3, %c0_4] : memref<1x2x32xf32, #tpu.memory_space<vmem>>, vector<1x2x32xf32>
    %3 = vector.shape_cast %2 : vector<1x2x32xf32> to vector<2x32xf32>
    %c0_5 = arith.constant 0 : index
    %c0_6 = arith.constant 0 : index
    %4 = vector.load %arg6[%c0_5, %c0_6] : memref<8x32xf32, #tpu.memory_space<vmem>>, vector<1x32xf32>
    %c1 = arith.constant 1 : index
    %c0_7 = arith.constant 0 : index
    %5 = vector.load %arg6[%c1, %c0_7] : memref<8x32xf32, #tpu.memory_space<vmem>>, vector<1x32xf32>
    %c2 = arith.constant 2 : index
    %c0_8 = arith.constant 0 : index
    %6 = vector.load %arg6[%c2, %c0_8] : memref<8x32xf32, #tpu.memory_space<vmem>>, vector<1x32xf32>
    %c3 = arith.constant 3 : index
    %c0_9 = arith.constant 0 : index
    %7 = vector.load %arg6[%c3, %c0_9] : memref<8x32xf32, #tpu.memory_space<vmem>>, vector<1x1xf32>
    %c4 = arith.constant 4 : index
    %c0_10 = arith.constant 0 : index
    %8 = vector.load %arg6[%c4, %c0_10] : memref<8x32xf32, #tpu.memory_space<vmem>>, vector<1x1xf32>
    %c0_11 = arith.constant 0 : index
    %c0_12 = arith.constant 0 : index
    %9 = vector.load %arg7[%c0_11, %c0_12] : memref<32x8xf32, #tpu.memory_space<vmem>>, vector<32x1xf32>
    %c0_13 = arith.constant 0 : index
    %c1_14 = arith.constant 1 : index
    %10 = vector.load %arg7[%c0_13, %c1_14] : memref<32x8xf32, #tpu.memory_space<vmem>>, vector<32x1xf32>
    %c0_15 = arith.constant 0 : index
    %c0_16 = arith.constant 0 : index
    %11 = vector.load %arg5[%c0_15, %c0_16] : memref<32x64xf32, #tpu.memory_space<vmem>>, vector<32x64xf32>
    %c0_17 = arith.constant 0 : index
    %c0_18 = arith.constant 0 : index
    %12 = vector.load %arg3[%c0_17, %c0_18] : memref<32x32xf32, #tpu.memory_space<vmem>>, vector<32x32xf32>
    %cst = arith.constant dense<0.000000e+00> : vector<128x32xf32>
    %13 = tpu.matmul %1, %12, %cst {dimension_numbers = #tpu.dot_dimension_numbers<[1], [0], [0], [1], [0, 0, 1, 1], [], []>} : vector<128x32xf32>, vector<32x32xf32>, vector<128x32xf32> -> vector<128x32xf32>
    %14 = vector.broadcast %4 : vector<1x32xf32> to vector<128x32xf32>
    %15 = arith.addf %13, %14 : vector<128x32xf32>
    %16 = vector.shape_cast %15 : vector<128x32xf32> to vector<2x64x32xf32>
    %c0_19 = arith.constant 0 : index
    %c0_20 = arith.constant 0 : index
    %17 = vector.load %arg4[%c0_19, %c0_20] : memref<32x32xf32, #tpu.memory_space<vmem>>, vector<32x32xf32>
    %cst_21 = arith.constant dense<0.000000e+00> : vector<2x32xf32>
    %18 = tpu.matmul %3, %17, %cst_21 {dimension_numbers = #tpu.dot_dimension_numbers<[1], [0], [0], [1], [0, 0, 1, 1], [], []>} : vector<2x32xf32>, vector<32x32xf32>, vector<2x32xf32> -> vector<2x32xf32>
    %19 = vector.broadcast %5 : vector<1x32xf32> to vector<2x32xf32>
    %20 = arith.addf %18, %19 : vector<2x32xf32>
    %21 = vector.shape_cast %20 : vector<2x32xf32> to vector<2x1x32xf32>
    %22 = vector.broadcast %21 : vector<2x1x32xf32> to vector<2x64x32xf32>
    %23 = arith.addf %16, %22 : vector<2x64x32xf32>
    %24 = math.tanh %23 : vector<2x64x32xf32>
    %25 = vector.shape_cast %6 : vector<1x32xf32> to vector<1x1x32xf32>
    %26 = vector.broadcast %25 : vector<1x1x32xf32> to vector<2x64x32xf32>
    %27 = arith.mulf %24, %26 : vector<2x64x32xf32>
    %cst_22 = arith.constant dense<0.000000e+00> : vector<2x64xf32>
    %28 = vector.multi_reduction <add>, %27, %cst_22 [2] : vector<2x64x32xf32> to vector<2x64xf32>
    %29 = vector.broadcast %7 : vector<1x1xf32> to vector<2x64xf32>
    %30 = arith.addf %28, %29 : vector<2x64xf32>
    %cst_23 = arith.constant dense<0xFF800000> : vector<2xf32>
    %31 = vector.multi_reduction <maximumf>, %30, %cst_23 [1] : vector<2x64xf32> to vector<2xf32>
    %32 = vector.shape_cast %31 : vector<2xf32> to vector<2x1xf32>
    %33 = vector.broadcast %32 : vector<2x1xf32> to vector<2x64xf32>
    %34 = arith.subf %30, %33 : vector<2x64xf32>
    %35 = math.exp %34 : vector<2x64xf32>
    %cst_24 = arith.constant dense<0.000000e+00> : vector<2xf32>
    %36 = vector.multi_reduction <add>, %35, %cst_24 [1] : vector<2x64xf32> to vector<2xf32>
    %37 = vector.shape_cast %36 : vector<2xf32> to vector<2x1xf32>
    %cst_25 = arith.constant 1.000000e+00 : f32
    %38 = vector.broadcast %cst_25 : f32 to vector<2x1xf32>
    %39 = arith.divf %38, %37 : vector<2x1xf32>
    %40 = vector.broadcast %39 : vector<2x1xf32> to vector<2x64xf32>
    %41 = arith.mulf %35, %40 : vector<2x64xf32>
    %42 = vector.shape_cast %41 : vector<2x64xf32> to vector<2x64x1xf32>
    %43 = vector.broadcast %42 : vector<2x64x1xf32> to vector<2x64x32xf32>
    %44 = arith.mulf %43, %0 : vector<2x64x32xf32>
    %cst_26 = arith.constant dense<0.000000e+00> : vector<2x32xf32>
    %45 = vector.multi_reduction <add>, %44, %cst_26 [1] : vector<2x64x32xf32> to vector<2x32xf32>
    %46 = vector.extract_strided_slice %0 {offsets = [0, 0, 0], sizes = [1, 64, 32], strides = [1, 1, 1]} : vector<2x64x32xf32> to vector<1x64x32xf32>
    %47 = vector.shape_cast %46 : vector<1x64x32xf32> to vector<64x32xf32>
    %cst_27 = arith.constant dense<0.000000e+00> : vector<32x32xf32>
    %48 = tpu.matmul %11, %47, %cst_27 {dimension_numbers = #tpu.dot_dimension_numbers<[1], [0], [0], [1], [0, 0, 1, 1], [], []>} : vector<32x64xf32>, vector<64x32xf32>, vector<32x32xf32> -> vector<32x32xf32>
    %49 = vector.extract_strided_slice %0 {offsets = [1, 0, 0], sizes = [1, 64, 32], strides = [1, 1, 1]} : vector<2x64x32xf32> to vector<1x64x32xf32>
    %50 = vector.shape_cast %49 : vector<1x64x32xf32> to vector<64x32xf32>
    %cst_28 = arith.constant dense<0.000000e+00> : vector<32x32xf32>
    %51 = tpu.matmul %11, %50, %cst_28 {dimension_numbers = #tpu.dot_dimension_numbers<[1], [0], [0], [1], [0, 0, 1, 1], [], []>} : vector<32x64xf32>, vector<64x32xf32>, vector<32x32xf32> -> vector<32x32xf32>
    %52 = vector.shape_cast %48 : vector<32x32xf32> to vector<1x32x32xf32>
    %53 = vector.shape_cast %51 : vector<32x32xf32> to vector<1x32x32xf32>
    %54 = tpu.concatenate %52, %53 in 0 : vector<1x32x32xf32>, vector<1x32x32xf32> -> vector<2x32x32xf32>
    %55 = vector.shape_cast %9 : vector<32x1xf32> to vector<1x32x1xf32>
    %56 = vector.broadcast %55 : vector<1x32x1xf32> to vector<2x32x32xf32>
    %57 = arith.addf %54, %56 : vector<2x32x32xf32>
    %58 = vector.shape_cast %20 : vector<2x32xf32> to vector<2x32x1xf32>
    %59 = vector.broadcast %58 : vector<2x32x1xf32> to vector<2x32x32xf32>
    %60 = arith.addf %57, %59 : vector<2x32x32xf32>
    %61 = math.tanh %60 : vector<2x32x32xf32>
    %62 = vector.shape_cast %10 : vector<32x1xf32> to vector<1x32x1xf32>
    %63 = vector.broadcast %62 : vector<1x32x1xf32> to vector<2x32x32xf32>
    %64 = arith.mulf %61, %63 : vector<2x32x32xf32>
    %cst_29 = arith.constant dense<0.000000e+00> : vector<2x32xf32>
    %65 = vector.multi_reduction <add>, %64, %cst_29 [1] : vector<2x32x32xf32> to vector<2x32xf32>
    %66 = vector.broadcast %8 : vector<1x1xf32> to vector<2x32xf32>
    %67 = arith.addf %65, %66 : vector<2x32xf32>
    %cst_30 = arith.constant dense<0xFF800000> : vector<2xf32>
    %68 = vector.multi_reduction <maximumf>, %67, %cst_30 [1] : vector<2x32xf32> to vector<2xf32>
    %69 = vector.shape_cast %68 : vector<2xf32> to vector<2x1xf32>
    %70 = vector.broadcast %69 : vector<2x1xf32> to vector<2x32xf32>
    %71 = arith.subf %67, %70 : vector<2x32xf32>
    %72 = math.exp %71 : vector<2x32xf32>
    %cst_31 = arith.constant dense<0.000000e+00> : vector<2xf32>
    %73 = vector.multi_reduction <add>, %72, %cst_31 [1] : vector<2x32xf32> to vector<2xf32>
    %74 = vector.shape_cast %73 : vector<2xf32> to vector<2x1xf32>
    %cst_32 = arith.constant 1.000000e+00 : f32
    %75 = vector.broadcast %cst_32 : f32 to vector<2x1xf32>
    %76 = arith.divf %75, %74 : vector<2x1xf32>
    %77 = vector.broadcast %76 : vector<2x1xf32> to vector<2x32xf32>
    %78 = arith.mulf %72, %77 : vector<2x32xf32>
    %79 = vector.shape_cast %78 : vector<2x32xf32> to vector<2x1x32xf32>
    %80 = vector.broadcast %79 : vector<2x1x32xf32> to vector<2x64x32xf32>
    %81 = arith.mulf %80, %0 : vector<2x64x32xf32>
    %cst_33 = arith.constant dense<0.000000e+00> : vector<2x64xf32>
    %82 = vector.multi_reduction <add>, %81, %cst_33 [2] : vector<2x64x32xf32> to vector<2x64xf32>
    %83 = tpu.concatenate %45, %82, %41 in 1 : vector<2x32xf32>, vector<2x64xf32>, vector<2x64xf32> -> vector<2x160xf32>
    %cst_34 = arith.constant 0.000000e+00 : f32
    %84 = vector.broadcast %cst_34 : f32 to vector<2x96xf32>
    %85 = tpu.concatenate %83, %84 in 1 : vector<2x160xf32>, vector<2x96xf32> -> vector<2x256xf32>
    %c0_35 = arith.constant 0 : index
    %c0_36 = arith.constant 0 : index
    %c0_37 = arith.constant 0 : index
    %86 = vector.load %arg8[%c0_35, %c0_36, %c0_37] : memref<1x2x256xf32, #tpu.memory_space<vmem>>, vector<1x2x256xf32>
    %87 = vector.shape_cast %86 : vector<1x2x256xf32> to vector<2x256xf32>
    %88 = vector.shape_cast %85 : vector<2x256xf32> to vector<1x2x256xf32>
    tpu.vector_store %arg8[%c0_35, %c0_36, %c0_37], %88 {strides = array<i32>} : memref<1x2x256xf32, #tpu.memory_space<vmem>>, vector<1x2x256xf32>,
    return
  }
  func.func @transform_0(%arg0: i32) -> (i32, i32, i32) {
    %c0_i32 = arith.constant 0 : i32
    %c0_i32_0 = arith.constant 0 : i32
    %c0_i32_1 = arith.constant 0 : i32
    return %arg0, %c0_i32, %c0_i32_0 : i32, i32, i32
  }
  func.func @transform_1(%arg0: i32) -> (i32, i32, i32) {
    %c0_i32 = arith.constant 0 : i32
    %c0_i32_0 = arith.constant 0 : i32
    %c0_i32_1 = arith.constant 0 : i32
    return %arg0, %c0_i32, %c0_i32_0 : i32, i32, i32
  }
  func.func @transform_2(%arg0: i32) -> (i32, i32) {
    %c0_i32 = arith.constant 0 : i32
    %c0_i32_0 = arith.constant 0 : i32
    %c0_i32_1 = arith.constant 0 : i32
    return %c0_i32, %c0_i32_0 : i32, i32
  }
  func.func @transform_3(%arg0: i32) -> (i32, i32) {
    %c0_i32 = arith.constant 0 : i32
    %c0_i32_0 = arith.constant 0 : i32
    %c0_i32_1 = arith.constant 0 : i32
    return %c0_i32, %c0_i32_0 : i32, i32
  }
  func.func @transform_4(%arg0: i32) -> (i32, i32) {
    %c0_i32 = arith.constant 0 : i32
    %c0_i32_0 = arith.constant 0 : i32
    %c0_i32_1 = arith.constant 0 : i32
    return %c0_i32, %c0_i32_0 : i32, i32
  }
  func.func @transform_5(%arg0: i32) -> (i32, i32) {
    %c0_i32 = arith.constant 0 : i32
    %c0_i32_0 = arith.constant 0 : i32
    %c0_i32_1 = arith.constant 0 : i32
    return %c0_i32, %c0_i32_0 : i32, i32
  }
  func.func @transform_6(%arg0: i32) -> (i32, i32) {
    %c0_i32 = arith.constant 0 : i32
    %c0_i32_0 = arith.constant 0 : i32
    %c0_i32_1 = arith.constant 0 : i32
    return %c0_i32, %c0_i32_0 : i32, i32
  }
  func.func @transform_7(%arg0: i32) -> (i32, i32, i32) {
    %c0_i32 = arith.constant 0 : i32
    %c0_i32_0 = arith.constant 0 : i32
    %c0_i32_1 = arith.constant 0 : i32
    return %arg0, %c0_i32, %c0_i32_0 : i32, i32, i32
  }
}

</mosaic_0001>

<llo_original>
// kernel: tpu_custom_call.1
$region0: #{tpu_custom_call.1}
  #allocation0 [shape = 'u32[]', space=smem, size = 0x4, offset = 0x4, fixed_abs, tag = 'smem constant byte address 0x4 - core index']
  #allocation1 [shape = 'u32[72,128]{1,0:T(1,128)}', space=vmem, size = 0x9000, scoped, tag = 'internal scratch']
  %s0 = inlined_call_operand.vmem [shape: f32[4,64,32], index: 0, kind: input, shape index: {}]
  %s1 = inlined_call_operand.vmem [shape: f32[2,2,32], index: 1, kind: input, shape index: {}]
  %s2 = inlined_call_operand.vmem [shape: f32[32,32], index: 2, kind: input, shape index: {}]
  %s3 = inlined_call_operand.vmem [shape: f32[32,32], index: 3, kind: input, shape index: {}]
  %s4 = inlined_call_operand.vmem [shape: f32[32,64], index: 4, kind: input, shape index: {}]
  %s5 = inlined_call_operand.vmem [shape: f32[8,32], index: 5, kind: input, shape index: {}]
  %s6 = inlined_call_operand.vmem [shape: f32[32,8], index: 6, kind: input, shape index: {}]
  %s7 = inlined_call_operand.hbm [shape: f32[2,2,256], index: 7, kind: output, shape index: {}]
  %s8 = sld [smem:[#allocation0]]
  $region61: #{tpu_custom_call.1} parent=0
    _
  %s10 = ssub.s32 1, %s8
  %s11 = scalar_select 0, %s10, %s8
  $region1: #{tpu_custom_call.1} parent=0
    #allocation2 [shape = 'u8[4096]{0}', space=vmem, size = 0x1000, scoped, tag = 'output window, operand 0']
    #allocation3 [shape = 's32[2]{0}', space=sflag, size = 0x8, scoped, tag = 'scoped memory for tpu_custom_call.1']
    %12 = vsyncpa [#allocation3], 0
    %s13 = scalar_lea.sflag [#allocation3], 1
    %14 = vsyncpa %s13, 0
    loop: start=0, step=1, limit=4
    $region2: #{tpu_custom_call.1} parent=1 // loop_pre_header
      _
    $region3: #{tpu_custom_call.1} parent=1 // loop_header
      %s16 = sphi 0, %s20
      %p17 = scmp.ge.s32.totalorder %s16, 4
      %s26 = sphi 0, %s28
      %s29 = sphi 0, %s26
      %s30 = sphi 0, %s29
      %s46 = sphi 0, %s30
      %s52 = sphi 0, %s54
      %s55 = sphi 0, %s52
      %s56 = sphi 0, %s55
      %s72 = sphi 0, %s56
      %s76 = sphi 0, %s76
      %s78 = sphi 0, %s76
      %s79 = sphi 0, %s78
      %s93 = sphi 0, %s79
      %s97 = sphi 0, %s97
      %s99 = sphi 0, %s97
      %s100 = sphi 0, %s99
      %s114 = sphi 0, %s100
      %s118 = sphi 0, %s118
      %s120 = sphi 0, %s118
      %s121 = sphi 0, %s120
      %s135 = sphi 0, %s121
      %s139 = sphi 0, %s139
      %s141 = sphi 0, %s139
      %s142 = sphi 0, %s141
      %s156 = sphi 0, %s142
      %s160 = sphi 0, %s160
      %s162 = sphi 0, %s160
      %s163 = sphi 0, %s162
      %s177 = sphi 0, %s163
      %s183 = sphi 0, %s185
      %s186 = sphi 0, %s183
      %s187 = sphi 0, %s186
      %s203 = sphi 0, %s187
    $region4: #{tpu_custom_call.1} parent=1 // loop_header_branch
      %19 = sbr.rel (%p17) target = $region8
    $region5: #{tpu_custom_call.1} parent=1 // loop_body
      %s21 = ssub.s32 %s16, 1
      %s22 = ssub.s32 %s16, 2
      %s23 = sadd.s32 %s16, 1
      %s24 = ssub.s32 %s16, %s23
      %p25 = scmp.eq.s32.totalorder %s24, 0
      %s27 = sadd.s32 %s26, 1
      %s28 = scalar_select %p25, %s26, %s27
      %p31 = pneg %p25
      %p32 = scmp.eq.s32.totalorder %s16, 1
      %p33 = por %p31, %p32
      %p34 = scmp.ne.s32.totalorder %s26, %s29
      %p35 = scmp.eq.s32.totalorder %s16, 0
      %p36 = por %p34, %p35
      %p37 = scmp.ne.s32.totalorder %s26, %s29
      %p38 = scmp.eq.s32.totalorder %s21, 1
      %p39 = por %p37, %p38
      %p40 = scmp.ne.s32.totalorder %s29, %s30
      %p41 = scmp.eq.s32.totalorder %s21, 0
      %p42 = por %p40, %p41
      %p43 = scmp.ne.s32.totalorder %s29, %s30
      %p44 = scmp.eq.s32.totalorder %s22, 1
      %p45 = por %p43, %p44
      %p47 = scmp.ne.s32.totalorder %s30, %s46
      %p48 = scmp.eq.s32.totalorder %s22, 0
      %p49 = por %p47, %p48
      %s50 = ssub.s32 %s16, %s23
      %p51 = scmp.eq.s32.totalorder %s50, 0
      %s53 = sadd.s32 %s52, 1
      %s54 = scalar_select %p51, %s52, %s53
      %p57 = pneg %p51
      %p58 = scmp.eq.s32.totalorder %s16, 1
      %p59 = por %p57, %p58
      %p60 = scmp.ne.s32.totalorder %s52, %s55
      %p61 = scmp.eq.s32.totalorder %s16, 0
      %p62 = por %p60, %p61
      %p63 = scmp.ne.s32.totalorder %s52, %s55
      %p64 = scmp.eq.s32.totalorder %s21, 1
      %p65 = por %p63, %p64
      %p66 = scmp.ne.s32.totalorder %s55, %s56
      %p67 = scmp.eq.s32.totalorder %s21, 0
      %p68 = por %p66, %p67
      %p69 = scmp.ne.s32.totalorder %s55, %s56
      %p70 = scmp.eq.s32.totalorder %s22, 1
      %p71 = por %p69, %p70
      %p73 = scmp.ne.s32.totalorder %s56, %s72
      %p74 = scmp.eq.s32.totalorder %s22, 0
      %p75 = por %p73, %p74
      %s77 = sadd.s32 %s76, 1
      %p80 = scmp.eq.s32.totalorder %s16, 1
      %p81 = scmp.ne.s32.totalorder %s76, %s78
      %p82 = scmp.eq.s32.totalorder %s16, 0
      %p83 = por %p81, %p82
      %p84 = scmp.ne.s32.totalorder %s76, %s78
      %p85 = scmp.eq.s32.totalorder %s21, 1
      %p86 = por %p84, %p85
      %p87 = scmp.ne.s32.totalorder %s78, %s79
      %p88 = scmp.eq.s32.totalorder %s21, 0
      %p89 = por %p87, %p88
      %p90 = scmp.ne.s32.totalorder %s78, %s79
      %p91 = scmp.eq.s32.totalorder %s22, 1
      %p92 = por %p90, %p91
      %p94 = scmp.ne.s32.totalorder %s79, %s93
      %p95 = scmp.eq.s32.totalorder %s22, 0
      %p96 = por %p94, %p95
      %s98 = sadd.s32 %s97, 1
      %p101 = scmp.eq.s32.totalorder %s16, 1
      %p102 = scmp.ne.s32.totalorder %s97, %s99
      %p103 = scmp.eq.s32.totalorder %s16, 0
      %p104 = por %p102, %p103
      %p105 = scmp.ne.s32.totalorder %s97, %s99
      %p106 = scmp.eq.s32.totalorder %s21, 1
      %p107 = por %p105, %p106
      %p108 = scmp.ne.s32.totalorder %s99, %s100
      %p109 = scmp.eq.s32.totalorder %s21, 0
      %p110 = por %p108, %p109
      %p111 = scmp.ne.s32.totalorder %s99, %s100
      %p112 = scmp.eq.s32.totalorder %s22, 1
      %p113 = por %p111, %p112
      %p115 = scmp.ne.s32.totalorder %s100, %s114
      %p116 = scmp.eq.s32.totalorder %s22, 0
      %p117 = por %p115, %p116
      %s119 = sadd.s32 %s118, 1
      %p122 = scmp.eq.s32.totalorder %s16, 1
      %p123 = scmp.ne.s32.totalorder %s118, %s120
      %p124 = scmp.eq.s32.totalorder %s16, 0
      %p125 = por %p123, %p124
      %p126 = scmp.ne.s32.totalorder %s118, %s120
      %p127 = scmp.eq.s32.totalorder %s21, 1
      %p128 = por %p126, %p127
      %p129 = scmp.ne.s32.totalorder %s120, %s121
      %p130 = scmp.eq.s32.totalorder %s21, 0
      %p131 = por %p129, %p130
      %p132 = scmp.ne.s32.totalorder %s120, %s121
      %p133 = scmp.eq.s32.totalorder %s22, 1
      %p134 = por %p132, %p133
      %p136 = scmp.ne.s32.totalorder %s121, %s135
      %p137 = scmp.eq.s32.totalorder %s22, 0
      %p138 = por %p136, %p137
      %s140 = sadd.s32 %s139, 1
      %p143 = scmp.eq.s32.totalorder %s16, 1
      %p144 = scmp.ne.s32.totalorder %s139, %s141
      %p145 = scmp.eq.s32.totalorder %s16, 0
      %p146 = por %p144, %p145
      %p147 = scmp.ne.s32.totalorder %s139, %s141
      %p148 = scmp.eq.s32.totalorder %s21, 1
      %p149 = por %p147, %p148
      %p150 = scmp.ne.s32.totalorder %s141, %s142
      %p151 = scmp.eq.s32.totalorder %s21, 0
      %p152 = por %p150, %p151
      %p153 = scmp.ne.s32.totalorder %s141, %s142
      %p154 = scmp.eq.s32.totalorder %s22, 1
      %p155 = por %p153, %p154
      %p157 = scmp.ne.s32.totalorder %s142, %s156
      %p158 = scmp.eq.s32.totalorder %s22, 0
      %p159 = por %p157, %p158
      %s161 = sadd.s32 %s160, 1
      %p164 = scmp.eq.s32.totalorder %s16, 1
      %p165 = scmp.ne.s32.totalorder %s160, %s162
      %p166 = scmp.eq.s32.totalorder %s16, 0
      %p167 = por %p165, %p166
      %p168 = scmp.ne.s32.totalorder %s160, %s162
      %p169 = scmp.eq.s32.totalorder %s21, 1
      %p170 = por %p168, %p169
      %p171 = scmp.ne.s32.totalorder %s162, %s163
      %p172 = scmp.eq.s32.totalorder %s21, 0
      %p173 = por %p171, %p172
      %p174 = scmp.ne.s32.totalorder %s162, %s163
      %p175 = scmp.eq.s32.totalorder %s22, 1
      %p176 = por %p174, %p175
      %p178 = scmp.ne.s32.totalorder %s163, %s177
      %p179 = scmp.eq.s32.totalorder %s22, 0
      %p180 = por %p178, %p179
      %s181 = ssub.s32 %s16, %s23
      %p182 = scmp.eq.s32.totalorder %s181, 0
      %s184 = sadd.s32 %s183, 1
      %s185 = scalar_select %p182, %s183, %s184
      %p188 = pneg %p182
      %p189 = scmp.eq.s32.totalorder %s16, 1
      %p190 = por %p188, %p189
      %p191 = scmp.ne.s32.totalorder %s183, %s186
      %p192 = scmp.eq.s32.totalorder %s16, 0
      %p193 = por %p191, %p192
      %p194 = scmp.ne.s32.totalorder %s183, %s186
      %p195 = scmp.eq.s32.totalorder %s21, 1
      %p196 = por %p194, %p195
      %p197 = scmp.ne.s32.totalorder %s186, %s187
      %p198 = scmp.eq.s32.totalorder %s21, 0
      %p199 = por %p197, %p198
      %p200 = scmp.ne.s32.totalorder %s186, %s187
      %p201 = scmp.eq.s32.totalorder %s22, 1
      %p202 = por %p200, %p201
      %p204 = scmp.ne.s32.totalorder %s187, %s203
      %p205 = scmp.eq.s32.totalorder %s22, 0
      %p206 = por %p204, %p205
      %p207 = scmp.le.s32.totalorder 1, %s16
      %p208 = scmp.lt.s32.totalorder %s16, 3
      %p209 = pnand %p207, %p208
      %p210 = pneg %p209
      // Predicated region
      $region9: #{tpu_custom_call.1} parent=5 // pred_check
        _
      $region10: #{tpu_custom_call.1} parent=5 // pred_check_branch
        %212 = sbr.rel (%p209) target = $region12
      $region11: #{tpu_custom_call.1} parent=5 // pred_region
        %s213 = ssub.s32 %s16, 1
        // Predicated region
        $region13: #{tpu_custom_call.1} parent=11 // pred_check
          %p214 = pneg %p89
        $region14: #{tpu_custom_call.1} parent=11 // pred_check_branch
          %216 = sbr.rel (%p214) target = $region16
        $region15: #{tpu_custom_call.1} parent=11 // pred_region
          _
        $region16: #{tpu_custom_call.1} parent=11 // pred_fallthru
          _
        // Predicated region
        $region17: #{tpu_custom_call.1} parent=11 // pred_check
          %p217 = pneg %p110
        $region18: #{tpu_custom_call.1} parent=11 // pred_check_branch
          %219 = sbr.rel (%p217) target = $region20
        $region19: #{tpu_custom_call.1} parent=11 // pred_region
          _
        $region20: #{tpu_custom_call.1} parent=11 // pred_fallthru
          _
        // Predicated region
        $region21: #{tpu_custom_call.1} parent=11 // pred_check
          %p220 = pneg %p131
        $region22: #{tpu_custom_call.1} parent=11 // pred_check_branch
          %222 = sbr.rel (%p220) target = $region24
        $region23: #{tpu_custom_call.1} parent=11 // pred_region
          _
        $region24: #{tpu_custom_call.1} parent=11 // pred_fallthru
          _
        // Predicated region
        $region25: #{tpu_custom_call.1} parent=11 // pred_check
          %p223 = pneg %p152
        $region26: #{tpu_custom_call.1} parent=11 // pred_check_branch
          %225 = sbr.rel (%p223) target = $region28
        $region27: #{tpu_custom_call.1} parent=11 // pred_region
          _
        $region28: #{tpu_custom_call.1} parent=11 // pred_fallthru
          _
        // Predicated region
        $region29: #{tpu_custom_call.1} parent=11 // pred_check
          %p226 = pneg %p173
        $region30: #{tpu_custom_call.1} parent=11 // pred_check_branch
          %228 = sbr.rel (%p226) target = $region32
        $region31: #{tpu_custom_call.1} parent=11 // pred_region
          _
        $region32: #{tpu_custom_call.1} parent=11 // pred_fallthru
          _
      $region12: #{tpu_custom_call.1} parent=5 // pred_fallthru
        _
      %p229 = scmp.lt.s32.totalorder %s16, 2
      // Predicated region
      $region33: #{tpu_custom_call.1} parent=5 // pred_check
        %p230 = pneg %p229
      $region34: #{tpu_custom_call.1} parent=5 // pred_check_branch
        %232 = sbr.rel (%p230) target = $region36
      $region35: #{tpu_custom_call.1} parent=5 // pred_region
        // Predicated region
        $region37: #{tpu_custom_call.1} parent=35 // pred_check
          %p233 = pneg %p36
        $region38: #{tpu_custom_call.1} parent=35 // pred_check_branch
          %235 = sbr.rel (%p233) target = $region40
        $region39: #{tpu_custom_call.1} parent=35 // pred_region
          %s236 = smul.u32 2, %s16
          %p237 = scmp.lt.s32.totalorder %s236, 3
          %s238 = scalar_select %p237, %s236, 3
          %s239 = smul.addr %s238, 8
          %s240 = smul.addr %s239, 8
          %s241 = scalar_lea.vmem %s0, %s240
          %s242 = smul.u32 2, %s16
        $region40: #{tpu_custom_call.1} parent=35 // pred_fallthru
          _
        // Predicated region
        $region41: #{tpu_custom_call.1} parent=35 // pred_check
          %p243 = pneg %p62
        $region42: #{tpu_custom_call.1} parent=35 // pred_check_branch
          %245 = sbr.rel (%p243) target = $region44
        $region43: #{tpu_custom_call.1} parent=35 // pred_region
          %p246 = scmp.lt.s32.totalorder %s16, 1
          %s247 = scalar_select %p246, %s16, 1
          %s248 = smul.addr %s247, 2
          %s249 = scalar_lea.vmem %s1, %s248
        $region44: #{tpu_custom_call.1} parent=35 // pred_fallthru
          _
      $region36: #{tpu_custom_call.1} parent=5 // pred_fallthru
        _
      %p250 = scmp.le.s32.totalorder 1, %s16
      %p251 = scmp.lt.s32.totalorder %s16, 3
      %p252 = pnand %p250, %p251
      %p253 = pneg %p252
      // Predicated region
      $region45: #{tpu_custom_call.1} parent=5 // pred_check
        _
      $region46: #{tpu_custom_call.1} parent=5 // pred_check_branch
        %255 = sbr.rel (%p252) target = $region48
      $region47: #{tpu_custom_call.1} parent=5 // pred_region
        %s256 = ssub.s32 %s16, 1
        %s257 = smul.u32 2, %s21
        %p258 = scmp.lt.s32.totalorder %s257, 3
        %s259 = scalar_select %p258, %s257, 3
        %s260 = smul.addr %s259, 8
        %s261 = smul.addr %s260, 8
        %s262 = scalar_lea.vmem %s0, %s261
        %p263 = pneg %p42
        %p264 = pneg %p39
        %p265 = scmp.lt.s32.totalorder %s21, 1
        %s266 = scalar_select %p265, %s21, 1
        %s267 = smul.addr %s266, 2
        %s268 = scalar_lea.vmem %s1, %s267
        %p269 = pneg %p68
        %p270 = pneg %p65
        %p271 = pneg %p89
        %p272 = pneg %p86
        %p273 = pneg %p110
        %p274 = pneg %p107
        %p275 = pneg %p131
        %p276 = pneg %p128
        %p277 = pneg %p152
        %p278 = pneg %p149
        %p279 = pneg %p173
        %p280 = pneg %p170
        %p281 = pneg %p199
        %p282 = pneg %p196
        %s283 = sand.u32 %s186, 1
        %s284 = scalar_lea.sflag [#allocation3], %s283
        %s285 = sand.u32 %s186, 1
        %s286 = smul.addr %s285, 4
        %s287 = scalar_lea.vmem [#allocation2], %s286
        %s288 = smul.u32 2, %s21
        %p289 = scmp.lt.s32.totalorder %s288, 3
        %s290 = scalar_select %p289, %s288, 3
        %s291 = smul.addr %s290, 8
        %s292 = smul.addr %s291, 8
        %s293 = scalar_lea.vmem %s0, %s292
        %s294 = smul.u32 2, %s21
        %p295 = scmp.lt.s32.totalorder %s21, 1
        %s296 = scalar_select %p295, %s21, 1
        %s297 = smul.addr %s296, 2
        %s298 = scalar_lea.vmem %s1, %s297
        %v299 = vld [vmem:[%s293] sm:$0xff]
        %v300 = vld [vmem:[%s293 + $0x8] sm:$0xff]
        %v301 = vld [vmem:[%s293 + $0x10] sm:$0xff]
        %v302 = vld [vmem:[%s293 + $0x18] sm:$0xff]
        %v303 = vld [vmem:[%s293 + $0x20] sm:$0xff]
        %v304 = vld [vmem:[%s293 + $0x28] sm:$0xff]
        %v305 = vld [vmem:[%s293 + $0x30] sm:$0xff]
        %v306 = vld [vmem:[%s293 + $0x38] sm:$0xff]
        %v307 = vld [vmem:[%s293 + $0x40] sm:$0xff]
        %v308 = vld [vmem:[%s293 + $0x48] sm:$0xff]
        %v309 = vld [vmem:[%s293 + $0x50] sm:$0xff]
        %v310 = vld [vmem:[%s293 + $0x58] sm:$0xff]
        %v311 = vld [vmem:[%s293 + $0x60] sm:$0xff]
        %v312 = vld [vmem:[%s293 + $0x68] sm:$0xff]
        %v313 = vld [vmem:[%s293 + $0x70] sm:$0xff]
        %v314 = vld [vmem:[%s293 + $0x78] sm:$0xff]
        %v315 = vld [vmem:[%s298] sm:$0x3]
        %v316 = vld [vmem:[%s5] sm:$0x1]
        %v317 = vld [vmem:[%s5 + $0x1] sm:$0x1]
        %v318 = vld [vmem:[%s5 + $0x2] sm:$0x1]
        %v319 = vld [vmem:[%s5 + $0x3] sm:$0x1]
        %v320 = vld [vmem:[%s5 + $0x4] sm:$0x1]
        %v321 = vld [vmem:[%s6] sm:$0xff]
        %v322 = vld [vmem:[%s6 + $0x8] sm:$0xff]
        %v323 = vld [vmem:[%s6 + $0x10] sm:$0xff]
        %v324 = vld [vmem:[%s6 + $0x18] sm:$0xff]
        %v325 = vld [vmem:[%s4] sm:$0xff]
        %v326 = vld [vmem:[%s4 + $0x8] sm:$0xff]
        %v327 = vld [vmem:[%s4 + $0x10] sm:$0xff]
        %v328 = vld [vmem:[%s4 + $0x18] sm:$0xff]
        %v329 = vld [vmem:[%s2] sm:$0xff]
        %v330 = vld [vmem:[%s2 + $0x8] sm:$0xff]
        %v331 = vld [vmem:[%s2 + $0x10] sm:$0xff]
        %v332 = vld [vmem:[%s2 + $0x18] sm:$0xff]
        %v333 = vperm.slane %v316, 0
        %vm334 = vcmask 261120
        %v336 = vsel %vm334, %v299, 0
        %v339 = vsel %vm334, %v300, 0
        %v342 = vsel %vm334, %v301, 0
        %v345 = vsel %vm334, %v302, 0
        %v348 = vsel %vm334, %v303, 0
        %v351 = vsel %vm334, %v304, 0
        %v354 = vsel %vm334, %v305, 0
        %v357 = vsel %vm334, %v306, 0
        %v360 = vsel %vm334, %v307, 0
        %v363 = vsel %vm334, %v308, 0
        %v366 = vsel %vm334, %v309, 0
        %v369 = vsel %vm334, %v310, 0
        %v372 = vsel %vm334, %v311, 0
        %v375 = vsel %vm334, %v312, 0
        %v378 = vsel %vm334, %v313, 0
        %v381 = vsel %vm334, %v314, 0
        %383 = vmatpush.msra.mxu0 0.0
        %384 = vmatpush.msra.mxu0 0.0
        %385 = vmatpush.msra.mxu0 0.0
        %386 = vmatpush.msra.mxu0 0.0
        %387 = vmatpush.msra.mxu0 0.0
        %388 = vmatpush.msra.mxu0 0.0
        %389 = vmatpush.msra.mxu0 0.0
        %390 = vmatpush.msra.mxu0 0.0
        %391 = vmatpush.msra.mxu0 0.0
        %392 = vmatpush.msra.mxu0 0.0
        %393 = vmatpush.msra.mxu0 0.0
        %394 = vmatpush.msra.mxu0 0.0
        %395 = vmatpush.msra.mxu0 %v332
        %396 = vmatpush.msra.mxu0 %v331
        %397 = vmatpush.msra.mxu0 %v330
        %398 = vmatpush.msra.mxu0 %v329
        %399 = vmatmul.f32.gmra.mxu0 %v336
        %v400 = vpop.f32.mrf.mxu0
        %v401 = vadd.f32 %v333, %v400
        %402 = vmatmul.f32.gmra.mxu0 %v339
        %v403 = vpop.f32.mrf.mxu0
        %v404 = vadd.f32 %v333, %v403
        %405 = vmatmul.f32.gmra.mxu0 %v342
        %v406 = vpop.f32.mrf.mxu0
        %v407 = vadd.f32 %v333, %v406
        %408 = vmatmul.f32.gmra.mxu0 %v345
        %v409 = vpop.f32.mrf.mxu0
        %v410 = vadd.f32 %v333, %v409
        %411 = vmatmul.f32.gmra.mxu0 %v348
        %v412 = vpop.f32.mrf.mxu0
        %v413 = vadd.f32 %v333, %v412
        %414 = vmatmul.f32.gmra.mxu0 %v351
        %v415 = vpop.f32.mrf.mxu0
        %v416 = vadd.f32 %v333, %v415
        %417 = vmatmul.f32.gmra.mxu0 %v354
        %v418 = vpop.f32.mrf.mxu0
        %v419 = vadd.f32 %v333, %v418
        %420 = vmatmul.f32.gmra.mxu0 %v357
        %v421 = vpop.f32.mrf.mxu0
        %v422 = vadd.f32 %v333, %v421
        %423 = vmatmul.f32.gmra.mxu0 %v360
        %v424 = vpop.f32.mrf.mxu0
        %v425 = vadd.f32 %v333, %v424
        %426 = vmatmul.f32.gmra.mxu0 %v363
        %v427 = vpop.f32.mrf.mxu0
        %v428 = vadd.f32 %v333, %v427
        %429 = vmatmul.f32.gmra.mxu0 %v366
        %v430 = vpop.f32.mrf.mxu0
        %v431 = vadd.f32 %v333, %v430
        %432 = vmatmul.f32.gmra.mxu0 %v369
        %v433 = vpop.f32.mrf.mxu0
        %v434 = vadd.f32 %v333, %v433
        %435 = vmatmul.f32.gmra.mxu0 %v372
        %v436 = vpop.f32.mrf.mxu0
        %v437 = vadd.f32 %v333, %v436
        %438 = vmatmul.f32.gmra.mxu0 %v375
        %v439 = vpop.f32.mrf.mxu0
        %v440 = vadd.f32 %v333, %v439
        %441 = vmatmul.f32.gmra.mxu0 %v378
        %v442 = vpop.f32.mrf.mxu0
        %v443 = vadd.f32 %v333, %v442
        %444 = vmatmul.f32.gmra.mxu0 %v381
        %v445 = vpop.f32.mrf.mxu0
        %v446 = vadd.f32 %v333, %v445
        %447 = vdwg.mxu0
        %v448 = vld [vmem:[%s3] sm:$0xff]
        %v449 = vld [vmem:[%s3 + $0x8] sm:$0xff]
        %v450 = vld [vmem:[%s3 + $0x10] sm:$0xff]
        %v451 = vld [vmem:[%s3 + $0x18] sm:$0xff]
        %v452 = vperm.slane %v317, 0
        %v454 = vsel %vm334, %v315, 0
        %456 = vmatpush.msra.mxu0 0.0
        %457 = vmatpush.msra.mxu0 0.0
        %458 = vmatpush.msra.mxu0 0.0
        %459 = vmatpush.msra.mxu0 0.0
        %460 = vmatpush.msra.mxu0 0.0
        %461 = vmatpush.msra.mxu0 0.0
        %462 = vmatpush.msra.mxu0 0.0
        %463 = vmatpush.msra.mxu0 0.0
        %464 = vmatpush.msra.mxu0 0.0
        %465 = vmatpush.msra.mxu0 0.0
        %466 = vmatpush.msra.mxu0 0.0
        %467 = vmatpush.msra.mxu0 0.0
        %468 = vmatpush.msra.mxu0 %v451
        %469 = vmatpush.msra.mxu0 %v450
        %470 = vmatpush.msra.mxu0 %v449
        %471 = vmatpush.msra.mxu0 %v448
        %472 = vmatmul.f32.gmra.mxu0 %v454
        %v473 = vpop.f32.mrf.mxu0
        %v474 = vadd.f32 %v452, %v473
        %475 = vdwg.mxu0
        %v477 = vrot.slane %v474, 1
        %v478 = vperm.slane %v474, 0
        %v479 = vperm.slane %v477, 0
        %v482 = vadd.f32 %v401, %v478
        %v483 = vadd.f32 %v404, %v478
        %v484 = vadd.f32 %v407, %v478
        %v485 = vadd.f32 %v410, %v478
        %v486 = vadd.f32 %v413, %v478
        %v487 = vadd.f32 %v416, %v478
        %v488 = vadd.f32 %v419, %v478
        %v489 = vadd.f32 %v422, %v478
        %v490 = vadd.f32 %v425, %v479
        %v491 = vadd.f32 %v428, %v479
        %v492 = vadd.f32 %v431, %v479
        %v493 = vadd.f32 %v434, %v479
        %v494 = vadd.f32 %v437, %v479
        %v495 = vadd.f32 %v440, %v479
        %v496 = vadd.f32 %v443, %v479
        %v497 = vadd.f32 %v446, %v479
        %v498 = vtanh.pop %v482
        %v499 = vtanh.pop %v483
        %v500 = vtanh.pop %v484
        %v501 = vtanh.pop %v485
        %v502 = vtanh.pop %v486
        %v503 = vtanh.pop %v487
        %v504 = vtanh.pop %v488
        %v505 = vtanh.pop %v489
        %v506 = vtanh.pop %v490
        %v507 = vtanh.pop %v491
        %v508 = vtanh.pop %v492
        %v509 = vtanh.pop %v493
        %v510 = vtanh.pop %v494
        %v511 = vtanh.pop %v495
        %v512 = vtanh.pop %v496
        %v513 = vtanh.pop %v497
        %v514 = vperm.slane %v318, 0
        %v515 = vmul.f32 %v498, %v514
        %v516 = vmul.f32 %v499, %v514
        %v517 = vmul.f32 %v500, %v514
        %v518 = vmul.f32 %v501, %v514
        %v519 = vmul.f32 %v502, %v514
        %v520 = vmul.f32 %v503, %v514
        %v521 = vmul.f32 %v504, %v514
        %v522 = vmul.f32 %v505, %v514
        %v523 = vmul.f32 %v506, %v514
        %v524 = vmul.f32 %v507, %v514
        %v525 = vmul.f32 %v508, %v514
        %v526 = vmul.f32 %v509, %v514
        %v527 = vmul.f32 %v510, %v514
        %v528 = vmul.f32 %v511, %v514
        %v529 = vmul.f32 %v512, %v514
        %v530 = vmul.f32 %v513, %v514
        %v531 = vsel %vm334, %v515, 0.0
        %532 = vadd.xlane.f32.xlu0 %v531
        %v533 = vpop.xlane.xlu0 %532
        %v534 = vsel %vm334, %v516, 0.0
        %535 = vadd.xlane.f32.xlu0 %v534
        %v536 = vpop.xlane.xlu0 %535
        %v537 = vsel %vm334, %v517, 0.0
        %538 = vadd.xlane.f32.xlu0 %v537
        %v539 = vpop.xlane.xlu0 %538
        %v540 = vsel %vm334, %v518, 0.0
        %541 = vadd.xlane.f32.xlu0 %v540
        %v542 = vpop.xlane.xlu0 %541
        %v543 = vsel %vm334, %v519, 0.0
        %544 = vadd.xlane.f32.xlu0 %v543
        %v545 = vpop.xlane.xlu0 %544
        %v546 = vsel %vm334, %v520, 0.0
        %547 = vadd.xlane.f32.xlu0 %v546
        %v548 = vpop.xlane.xlu0 %547
        %v549 = vsel %vm334, %v521, 0.0
        %550 = vadd.xlane.f32.xlu0 %v549
        %v551 = vpop.xlane.xlu0 %550
        %v552 = vsel %vm334, %v522, 0.0
        %553 = vadd.xlane.f32.xlu0 %v552
        %v554 = vpop.xlane.xlu0 %553
        %v555 = vsel %vm334, %v523, 0.0
        %556 = vadd.xlane.f32.xlu0 %v555
        %v557 = vpop.xlane.xlu0 %556
        %v558 = vsel %vm334, %v524, 0.0
        %559 = vadd.xlane.f32.xlu0 %v558
        %v560 = vpop.xlane.xlu0 %559
        %v561 = vsel %vm334, %v525, 0.0
        %562 = vadd.xlane.f32.xlu0 %v561
        %v563 = vpop.xlane.xlu0 %562
        %v564 = vsel %vm334, %v526, 0.0
        %565 = vadd.xlane.f32.xlu0 %v564
        %v566 = vpop.xlane.xlu0 %565
        %v567 = vsel %vm334, %v527, 0.0
        %568 = vadd.xlane.f32.xlu0 %v567
        %v569 = vpop.xlane.xlu0 %568
        %v570 = vsel %vm334, %v528, 0.0
        %571 = vadd.xlane.f32.xlu0 %v570
        %v572 = vpop.xlane.xlu0 %571
        %v573 = vsel %vm334, %v529, 0.0
        %574 = vadd.xlane.f32.xlu0 %v573
        %v575 = vpop.xlane.xlu0 %574
        %v576 = vsel %vm334, %v530, 0.0
        %577 = vadd.xlane.f32.xlu0 %v576
        %v578 = vpop.xlane.xlu0 %577
        %s580 = vtos %v319
        %v581 = vstv %s580
        %v583 = vadd.f32 %v533, %v581
        %v584 = vadd.f32 %v536, %v581
        %v585 = vadd.f32 %v539, %v581
        %v586 = vadd.f32 %v542, %v581
        %v587 = vadd.f32 %v545, %v581
        %v588 = vadd.f32 %v548, %v581
        %v589 = vadd.f32 %v551, %v581
        %v590 = vadd.f32 %v554, %v581
        %v591 = vadd.f32 %v557, %v581
        %v592 = vadd.f32 %v560, %v581
        %v593 = vadd.f32 %v563, %v581
        %v594 = vadd.f32 %v566, %v581
        %v595 = vadd.f32 %v569, %v581
        %v596 = vadd.f32 %v572, %v581
        %v597 = vadd.f32 %v575, %v581
        %v598 = vadd.f32 %v578, %v581
        %v615 = vlaneseq
        %v616 = vand.u32 %v615, 127
        %v617 = vperm.slane %v583, %v616
        %v618 = vadd.s32 %v616, 4294967288
        %v619 = vperm.slane %v584, %v618
        %vm620 = vcmask 130112
        %v621 = vsel %vm620, %v619, %v617
        %v622 = vadd.s32 %v616, 4294967280
        %v623 = vperm.slane %v585, %v622
        %vm624 = vcmask 195712
        %v625 = vsel %vm624, %v623, %v621
        %v626 = vadd.s32 %v616, 4294967272
        %v627 = vperm.slane %v586, %v626
        %vm628 = vcmask 261312
        %v629 = vsel %vm628, %v627, %v625
        %v630 = vadd.s32 %v616, 4294967264
        %v631 = vperm.slane %v587, %v630
        %vm632 = vcmask 326912
        %v633 = vsel %vm632, %v631, %v629
        %v634 = vadd.s32 %v616, 4294967256
        %v635 = vperm.slane %v588, %v634
        %vm636 = vcmask 392512
        %v637 = vsel %vm636, %v635, %v633
        %v638 = vadd.s32 %v616, 4294967248
        %v639 = vperm.slane %v589, %v638
        %vm640 = vcmask 458112
        %v641 = vsel %vm640, %v639, %v637
        %v642 = vadd.s32 %v616, 4294967240
        %v643 = vperm.slane %v590, %v642
        %vm644 = vcmask 523712
        %v645 = vsel %vm644, %v643, %v641
        %v646 = vperm.slane %v591, %v616
        %v647 = vperm.slane %v592, %v618
        %v648 = vsel %vm620, %v647, %v646
        %v649 = vperm.slane %v593, %v622
        %v650 = vsel %vm624, %v649, %v648
        %v651 = vperm.slane %v594, %v626
        %v652 = vsel %vm628, %v651, %v650
        %v653 = vperm.slane %v595, %v630
        %v654 = vsel %vm632, %v653, %v652
        %v655 = vperm.slane %v596, %v634
        %v656 = vsel %vm636, %v655, %v654
        %v657 = vperm.slane %v597, %v638
        %v658 = vsel %vm640, %v657, %v656
        %v659 = vperm.slane %v598, %v642
        %v660 = vsel %vm644, %v659, %v658
        %vm661 = vcmask 1041409
        %v662 = vsel %vm661, %v660, %v645
        %vm664 = vcmask 517120
        %v665 = vsel %vm664, %v662, -inf
        %666 = vmax.xlane.f32.xlu0 %v665
        %v667 = vpop.xlane.xlu0 %666
        %v669 = vperm.slane %v667, 0
        %v670 = vperm.slane %v667, 1
        %v673 = vsub.f32 %v583, %v669
        %v674 = vsub.f32 %v584, %v669
        %v675 = vsub.f32 %v585, %v669
        %v676 = vsub.f32 %v586, %v669
        %v677 = vsub.f32 %v587, %v669
        %v678 = vsub.f32 %v588, %v669
        %v679 = vsub.f32 %v589, %v669
        %v680 = vsub.f32 %v590, %v669
        %v681 = vsub.f32 %v591, %v670
        %v682 = vsub.f32 %v592, %v670
        %v683 = vsub.f32 %v593, %v670
        %v684 = vsub.f32 %v594, %v670
        %v685 = vsub.f32 %v595, %v670
        %v686 = vsub.f32 %v596, %v670
        %v687 = vsub.f32 %v597, %v670
        %v688 = vsub.f32 %v598, %v670
        %v689 = vmul.f32 %v673, 1.442695
        %v690 = vpow.pop %v689
        %v691 = vmul.f32 %v674, 1.442695
        %v692 = vpow.pop %v691
        %v693 = vmul.f32 %v675, 1.442695
        %v694 = vpow.pop %v693
        %v695 = vmul.f32 %v676, 1.442695
        %v696 = vpow.pop %v695
        %v697 = vmul.f32 %v677, 1.442695
        %v698 = vpow.pop %v697
        %v699 = vmul.f32 %v678, 1.442695
        %v700 = vpow.pop %v699
        %v701 = vmul.f32 %v679, 1.442695
        %v702 = vpow.pop %v701
        %v703 = vmul.f32 %v680, 1.442695
        %v704 = vpow.pop %v703
        %v705 = vmul.f32 %v681, 1.442695
        %v706 = vpow.pop %v705
        %v707 = vmul.f32 %v682, 1.442695
        %v708 = vpow.pop %v707
        %v709 = vmul.f32 %v683, 1.442695
        %v710 = vpow.pop %v709
        %v711 = vmul.f32 %v684, 1.442695
        %v712 = vpow.pop %v711
        %v713 = vmul.f32 %v685, 1.442695
        %v714 = vpow.pop %v713
        %v715 = vmul.f32 %v686, 1.442695
        %v716 = vpow.pop %v715
        %v717 = vmul.f32 %v687, 1.442695
        %v718 = vpow.pop %v717
        %v719 = vmul.f32 %v688, 1.442695
        %v720 = vpow.pop %v719
        %737 = vset.pattern.permute.xlu0 0
        %738 = vperm.xlu0 %737, %v690
        %v739 = vpop.permute.xlu0 %738
        %740 = vset.pattern.permute.xlu0 0
        %741 = vperm.xlu0 %740, %v692
        %v742 = vpop.permute.xlu0 %741
        %743 = vset.pattern.permute.xlu0 0
        %744 = vperm.xlu0 %743, %v694
        %v745 = vpop.permute.xlu0 %744
        %746 = vset.pattern.permute.xlu0 0
        %747 = vperm.xlu0 %746, %v696
        %v748 = vpop.permute.xlu0 %747
        %749 = vset.pattern.permute.xlu0 0
        %750 = vperm.xlu0 %749, %v698
        %v751 = vpop.permute.xlu0 %750
        %752 = vset.pattern.permute.xlu0 0
        %753 = vperm.xlu0 %752, %v700
        %v754 = vpop.permute.xlu0 %753
        %755 = vset.pattern.permute.xlu0 0
        %756 = vperm.xlu0 %755, %v702
        %v757 = vpop.permute.xlu0 %756
        %758 = vset.pattern.permute.xlu0 0
        %759 = vperm.xlu0 %758, %v704
        %v760 = vpop.permute.xlu0 %759
        %761 = vset.pattern.permute.xlu0 0
        %762 = vperm.xlu0 %761, %v706
        %v763 = vpop.permute.xlu0 %762
        %764 = vset.pattern.permute.xlu0 0
        %765 = vperm.xlu0 %764, %v708
        %v766 = vpop.permute.xlu0 %765
        %767 = vset.pattern.permute.xlu0 0
        %768 = vperm.xlu0 %767, %v710
        %v769 = vpop.permute.xlu0 %768
        %770 = vset.pattern.permute.xlu0 0
        %771 = vperm.xlu0 %770, %v712
        %v772 = vpop.permute.xlu0 %771
        %773 = vset.pattern.permute.xlu0 0
        %774 = vperm.xlu0 %773, %v714
        %v775 = vpop.permute.xlu0 %774
        %776 = vset.pattern.permute.xlu0 0
        %777 = vperm.xlu0 %776, %v716
        %v778 = vpop.permute.xlu0 %777
        %779 = vset.pattern.permute.xlu0 0
        %780 = vperm.xlu0 %779, %v718
        %v781 = vpop.permute.xlu0 %780
        %782 = vset.pattern.permute.xlu0 0
        %783 = vperm.xlu0 %782, %v720
        %v784 = vpop.permute.xlu0 %783
        %v785 = vperm.slane %v739, %v616
        %v786 = vperm.slane %v742, %v618
        %v787 = vsel %vm620, %v786, %v785
        %v788 = vperm.slane %v745, %v622
        %v789 = vsel %vm624, %v788, %v787
        %v790 = vperm.slane %v748, %v626
        %v791 = vsel %vm628, %v790, %v789
        %v792 = vperm.slane %v751, %v630
        %v793 = vsel %vm632, %v792, %v791
        %v794 = vperm.slane %v754, %v634
        %v795 = vsel %vm636, %v794, %v793
        %v796 = vperm.slane %v757, %v638
        %v797 = vsel %vm640, %v796, %v795
        %v798 = vperm.slane %v760, %v642
        %v799 = vsel %vm644, %v798, %v797
        %v800 = vperm.slane %v763, %v616
        %v801 = vperm.slane %v766, %v618
        %v802 = vsel %vm620, %v801, %v800
        %v803 = vperm.slane %v769, %v622
        %v804 = vsel %vm624, %v803, %v802
        %v805 = vperm.slane %v772, %v626
        %v806 = vsel %vm628, %v805, %v804
        %v807 = vperm.slane %v775, %v630
        %v808 = vsel %vm632, %v807, %v806
        %v809 = vperm.slane %v778, %v634
        %v810 = vsel %vm636, %v809, %v808
        %v811 = vperm.slane %v781, %v638
        %v812 = vsel %vm640, %v811, %v810
        %v813 = vperm.slane %v784, %v642
        %v814 = vsel %vm644, %v813, %v812
        %v815 = vsel %vm661, %v814, %v799
        %v817 = vsel %vm664, %v815, 0.0
        %818 = vadd.xlane.f32.xlu0 %v817
        %v819 = vpop.xlane.xlu0 %818
        %v820 = vrcp.pop %v819
        %v821 = vmul.f32 %v819, %v820
        %v822 = vsub.f32 1.0, %v821
        %v823 = vmul.f32 %v820, %v822
        %v824 = vadd.f32 %v820, %v823
        %vm825 = vweird.f32 %v819
        %vm826 = vweird.f32 %v820
        %vm827 = vmor %vm825, %vm826
        %v828 = vsel %vm827, %v820, %v824
        %v829 = vand.u32 2147483647, %v819
        %vm830 = vcmp.eq.f32.partialorder %v829, 8.507059e+37
        %v831 = vand.u32 %v819, 2147483648
        %v832 = vor.u32 1.1754944e-38, %v831
        %v833 = vsel %vm830, %v832, %v828
        %v834 = vmul.f32 1.0, %v833
        %v836 = vperm.slane %v834, 0
        %v837 = vperm.slane %v834, 1
        %v840 = vmul.f32 %v690, %v836
        %v841 = vmul.f32 %v692, %v836
        %v842 = vmul.f32 %v694, %v836
        %v843 = vmul.f32 %v696, %v836
        %v844 = vmul.f32 %v698, %v836
        %v845 = vmul.f32 %v700, %v836
        %v846 = vmul.f32 %v702, %v836
        %v847 = vmul.f32 %v704, %v836
        %v848 = vmul.f32 %v706, %v837
        %v849 = vmul.f32 %v708, %v837
        %v850 = vmul.f32 %v710, %v837
        %v851 = vmul.f32 %v712, %v837
        %v852 = vmul.f32 %v714, %v837
        %v853 = vmul.f32 %v716, %v837
        %v854 = vmul.f32 %v718, %v837
        %v855 = vmul.f32 %v720, %v837
        %857 = vset.pattern.permute.xlu0 0
        %858 = vperm.xlu0 %857, %v840
        %v859 = vpop.permute.xlu0 %858
        %862 = vset.pattern.permute.xlu0 0
        %863 = vperm.xlu0 %862, %v841
        %v864 = vpop.permute.xlu0 %863
        %867 = vset.pattern.permute.xlu0 0
        %868 = vperm.xlu0 %867, %v842
        %v869 = vpop.permute.xlu0 %868
        %872 = vset.pattern.permute.xlu0 0
        %873 = vperm.xlu0 %872, %v843
        %v874 = vpop.permute.xlu0 %873
        %877 = vset.pattern.permute.xlu0 0
        %878 = vperm.xlu0 %877, %v844
        %v879 = vpop.permute.xlu0 %878
        %882 = vset.pattern.permute.xlu0 0
        %883 = vperm.xlu0 %882, %v845
        %v884 = vpop.permute.xlu0 %883
        %887 = vset.pattern.permute.xlu0 0
        %888 = vperm.xlu0 %887, %v846
        %v889 = vpop.permute.xlu0 %888
        %892 = vset.pattern.permute.xlu0 0
        %893 = vperm.xlu0 %892, %v847
        %v894 = vpop.permute.xlu0 %893
        %897 = vset.pattern.permute.xlu0 0
        %898 = vperm.xlu0 %897, %v848
        %v899 = vpop.permute.xlu0 %898
        %902 = vset.pattern.permute.xlu0 0
        %903 = vperm.xlu0 %902, %v849
        %v904 = vpop.permute.xlu0 %903
        %907 = vset.pattern.permute.xlu0 0
        %908 = vperm.xlu0 %907, %v850
        %v909 = vpop.permute.xlu0 %908
        %912 = vset.pattern.permute.xlu0 0
        %913 = vperm.xlu0 %912, %v851
        %v914 = vpop.permute.xlu0 %913
        %917 = vset.pattern.permute.xlu0 0
        %918 = vperm.xlu0 %917, %v852
        %v919 = vpop.permute.xlu0 %918
        %922 = vset.pattern.permute.xlu0 0
        %923 = vperm.xlu0 %922, %v853
        %v924 = vpop.permute.xlu0 %923
        %927 = vset.pattern.permute.xlu0 0
        %928 = vperm.xlu0 %927, %v854
        %v929 = vpop.permute.xlu0 %928
        %932 = vset.pattern.permute.xlu0 0
        %933 = vperm.xlu0 %932, %v855
        %v934 = vpop.permute.xlu0 %933
        %v936 = vmul.f32 %v859, %v299
        %v937 = vmul.f32 %v864, %v300
        %v938 = vmul.f32 %v869, %v301
        %v939 = vmul.f32 %v874, %v302
        %v940 = vmul.f32 %v879, %v303
        %v941 = vmul.f32 %v884, %v304
        %v942 = vmul.f32 %v889, %v305
        %v943 = vmul.f32 %v894, %v306
        %v944 = vmul.f32 %v899, %v307
        %v945 = vmul.f32 %v904, %v308
        %v946 = vmul.f32 %v909, %v309
        %v947 = vmul.f32 %v914, %v310
        %v948 = vmul.f32 %v919, %v311
        %v949 = vmul.f32 %v924, %v312
        %v950 = vmul.f32 %v929, %v313
        %v951 = vmul.f32 %v934, %v314
        %v952 = vsel %vm334, %v936, 0.0
        %v953 = vsel %vm334, %v937, 0.0
        %v954 = vadd.f32 %v952, %v953
        %v955 = vsel %vm334, %v938, 0.0
        %v956 = vadd.f32 %v954, %v955
        %v957 = vsel %vm334, %v939, 0.0
        %v958 = vadd.f32 %v956, %v957
        %v959 = vsel %vm334, %v940, 0.0
        %v960 = vadd.f32 %v958, %v959
        %v961 = vsel %vm334, %v941, 0.0
        %v962 = vadd.f32 %v960, %v961
        %v963 = vsel %vm334, %v942, 0.0
        %v964 = vadd.f32 %v962, %v963
        %v965 = vsel %vm334, %v943, 0.0
        %v966 = vadd.f32 %v964, %v965
        %v967 = vrot.slane %v966, 4
        %v968 = vadd.f32 %v966, %v967
        %v969 = vrot.slane %v968, 2
        %v970 = vadd.f32 %v968, %v969
        %v971 = vrot.slane %v970, 1
        %v972 = vadd.f32 %v970, %v971
        %v973 = vsel %vm334, %v944, 0.0
        %v974 = vsel %vm334, %v945, 0.0
        %v975 = vadd.f32 %v973, %v974
        %v976 = vsel %vm334, %v946, 0.0
        %v977 = vadd.f32 %v975, %v976
        %v978 = vsel %vm334, %v947, 0.0
        %v979 = vadd.f32 %v977, %v978
        %v980 = vsel %vm334, %v948, 0.0
        %v981 = vadd.f32 %v979, %v980
        %v982 = vsel %vm334, %v949, 0.0
        %v983 = vadd.f32 %v981, %v982
        %v984 = vsel %vm334, %v950, 0.0
        %v985 = vadd.f32 %v983, %v984
        %v986 = vsel %vm334, %v951, 0.0
        %v987 = vadd.f32 %v985, %v986
        %v988 = vrot.slane %v987, 4
        %v989 = vadd.f32 %v987, %v988
        %v990 = vrot.slane %v989, 2
        %v991 = vadd.f32 %v989, %v990
        %v992 = vrot.slane %v991, 1
        %v993 = vadd.f32 %v991, %v992
        %vm994 = vcmask 523264
        %v996 = vsel %vm994, %v325, 0
        %v999 = vsel %vm994, %v326, 0
        %v1002 = vsel %vm994, %v327, 0
        %v1005 = vsel %vm994, %v328, 0
        %1007 = vmatpush.msra.mxu0 0.0
        %1008 = vmatpush.msra.mxu0 0.0
        %1009 = vmatpush.msra.mxu0 0.0
        %1010 = vmatpush.msra.mxu0 0.0
        %1011 = vmatpush.msra.mxu0 0.0
        %1012 = vmatpush.msra.mxu0 0.0
        %1013 = vmatpush.msra.mxu0 0.0
        %1014 = vmatpush.msra.mxu0 0.0
        %1015 = vmatpush.msra.mxu0 %v306
        %1016 = vmatpush.msra.mxu0 %v305
        %1017 = vmatpush.msra.mxu0 %v304
        %1018 = vmatpush.msra.mxu0 %v303
        %1019 = vmatpush.msra.mxu0 %v302
        %1020 = vmatpush.msra.mxu0 %v301
        %1021 = vmatpush.msra.mxu0 %v300
        %1022 = vmatpush.msra.mxu0 %v299
        %1023 = vmatmul.f32.gmra.mxu0 %v996
        %v1024 = vpop.f32.mrf.mxu0
        %v1025 = vadd.f32 0.0, %v1024
        %1026 = vmatmul.f32.gmra.mxu0 %v999
        %v1027 = vpop.f32.mrf.mxu0
        %v1028 = vadd.f32 0.0, %v1027
        %1029 = vmatmul.f32.gmra.mxu0 %v1002
        %v1030 = vpop.f32.mrf.mxu0
        %v1031 = vadd.f32 0.0, %v1030
        %1032 = vmatmul.f32.gmra.mxu0 %v1005
        %v1033 = vpop.f32.mrf.mxu0
        %v1034 = vadd.f32 0.0, %v1033
        %1035 = vdwg.mxu0
        %1036 = vmatpush.msra.mxu0 0.0
        %1037 = vmatpush.msra.mxu0 0.0
        %1038 = vmatpush.msra.mxu0 0.0
        %1039 = vmatpush.msra.mxu0 0.0
        %1040 = vmatpush.msra.mxu0 0.0
        %1041 = vmatpush.msra.mxu0 0.0
        %1042 = vmatpush.msra.mxu0 0.0
        %1043 = vmatpush.msra.mxu0 0.0
        %1044 = vmatpush.msra.mxu0 %v314
        %1045 = vmatpush.msra.mxu0 %v313
        %1046 = vmatpush.msra.mxu0 %v312
        %1047 = vmatpush.msra.mxu0 %v311
        %1048 = vmatpush.msra.mxu0 %v310
        %1049 = vmatpush.msra.mxu0 %v309
        %1050 = vmatpush.msra.mxu0 %v308
        %1051 = vmatpush.msra.mxu0 %v307
        %1052 = vmatmul.f32.gmra.mxu0 %v996
        %v1053 = vpop.f32.mrf.mxu0
        %v1054 = vadd.f32 0.0, %v1053
        %1055 = vmatmul.f32.gmra.mxu0 %v999
        %v1056 = vpop.f32.mrf.mxu0
        %v1057 = vadd.f32 0.0, %v1056
        %1058 = vmatmul.f32.gmra.mxu0 %v1002
        %v1059 = vpop.f32.mrf.mxu0
        %v1060 = vadd.f32 0.0, %v1059
        %1061 = vmatmul.f32.gmra.mxu0 %v1005
        %v1062 = vpop.f32.mrf.mxu0
        %v1063 = vadd.f32 0.0, %v1062
        %1064 = vdwg.mxu0
        %1066 = vset.pattern.permute.xlu0 0
        %1067 = vperm.xlu0 %1066, %v321
        %v1068 = vpop.permute.xlu0 %1067
        %1071 = vset.pattern.permute.xlu0 0
        %1072 = vperm.xlu0 %1071, %v322
        %v1073 = vpop.permute.xlu0 %1072
        %1076 = vset.pattern.permute.xlu0 0
        %1077 = vperm.xlu0 %1076, %v323
        %v1078 = vpop.permute.xlu0 %1077
        %1081 = vset.pattern.permute.xlu0 0
        %1082 = vperm.xlu0 %1081, %v324
        %v1083 = vpop.permute.xlu0 %1082
        %v1085 = vadd.f32 %v1025, %v1068
        %v1086 = vadd.f32 %v1028, %v1073
        %v1087 = vadd.f32 %v1031, %v1078
        %v1088 = vadd.f32 %v1034, %v1083
        %v1089 = vadd.f32 %v1054, %v1068
        %v1090 = vadd.f32 %v1057, %v1073
        %v1091 = vadd.f32 %v1060, %v1078
        %v1092 = vadd.f32 %v1063, %v1083
        %v1093 = vperm.slane %v474, 0
        %v1094 = vlaneseq
        %v1095 = vshrl.u32 %v1094, 7
        %1097 = vset.pattern.permute.xlu0 %v1095
        %1098 = vperm.xlu0 %1097, %v1093
        %v1099 = vpop.permute.xlu0 %1098
        %v1100 = vlaneseq
        %v1101 = vshrl.u32 %v1100, 7
        %v1102 = vadd.s32 %v1101, 8
        %1103 = vset.pattern.permute.xlu0 %v1102
        %1104 = vperm.xlu0 %1103, %v1093
        %v1105 = vpop.permute.xlu0 %1104
        %v1106 = vlaneseq
        %v1107 = vshrl.u32 %v1106, 7
        %v1108 = vadd.s32 %v1107, 16
        %1109 = vset.pattern.permute.xlu0 %v1108
        %1110 = vperm.xlu0 %1109, %v1093
        %v1111 = vpop.permute.xlu0 %1110
        %v1112 = vlaneseq
        %v1113 = vshrl.u32 %v1112, 7
        %v1114 = vadd.s32 %v1113, 24
        %1115 = vset.pattern.permute.xlu0 %v1114
        %1116 = vperm.xlu0 %1115, %v1093
        %v1117 = vpop.permute.xlu0 %1116
        %v1118 = vperm.slane %v474, 1
        %v1119 = vlaneseq
        %v1120 = vshrl.u32 %v1119, 7
        %1122 = vset.pattern.permute.xlu0 %v1120
        %1123 = vperm.xlu0 %1122, %v1118
        %v1124 = vpop.permute.xlu0 %1123
        %v1125 = vlaneseq
        %v1126 = vshrl.u32 %v1125, 7
        %v1127 = vadd.s32 %v1126, 8
        %1128 = vset.pattern.permute.xlu0 %v1127
        %1129 = vperm.xlu0 %1128, %v1118
        %v1130 = vpop.permute.xlu0 %1129
        %v1131 = vlaneseq
        %v1132 = vshrl.u32 %v1131, 7
        %v1133 = vadd.s32 %v1132, 16
        %1134 = vset.pattern.permute.xlu0 %v1133
        %1135 = vperm.xlu0 %1134, %v1118
        %v1136 = vpop.permute.xlu0 %1135
        %v1137 = vlaneseq
        %v1138 = vshrl.u32 %v1137, 7
        %v1139 = vadd.s32 %v1138, 24
        %1140 = vset.pattern.permute.xlu0 %v1139
        %1141 = vperm.xlu0 %1140, %v1118
        %v1142 = vpop.permute.xlu0 %1141
        %v1143 = vadd.f32 %v1085, %v1099
        %v1144 = vadd.f32 %v1086, %v1105
        %v1145 = vadd.f32 %v1087, %v1111
        %v1146 = vadd.f32 %v1088, %v1117
        %v1147 = vadd.f32 %v1089, %v1124
        %v1148 = vadd.f32 %v1090, %v1130
        %v1149 = vadd.f32 %v1091, %v1136
        %v1150 = vadd.f32 %v1092, %v1142
        %v1151 = vtanh.pop %v1143
        %v1152 = vtanh.pop %v1144
        %v1153 = vtanh.pop %v1145
        %v1154 = vtanh.pop %v1146
        %v1155 = vtanh.pop %v1147
        %v1156 = vtanh.pop %v1148
        %v1157 = vtanh.pop %v1149
        %v1158 = vtanh.pop %v1150
        %1159 = vset.pattern.permute.xlu0 1
        %1160 = vperm.xlu0 %1159, %v321
        %v1161 = vpop.permute.xlu0 %1160
        %1163 = vset.pattern.permute.xlu0 1
        %1164 = vperm.xlu0 %1163, %v322
        %v1165 = vpop.permute.xlu0 %1164
        %1167 = vset.pattern.permute.xlu0 1
        %1168 = vperm.xlu0 %1167, %v323
        %v1169 = vpop.permute.xlu0 %1168
        %1171 = vset.pattern.permute.xlu0 1
        %1172 = vperm.xlu0 %1171, %v324
        %v1173 = vpop.permute.xlu0 %1172
        %v1175 = vmul.f32 %v1151, %v1161
        %v1176 = vmul.f32 %v1152, %v1165
        %v1177 = vmul.f32 %v1153, %v1169
        %v1178 = vmul.f32 %v1154, %v1173
        %v1179 = vmul.f32 %v1155, %v1161
        %v1180 = vmul.f32 %v1156, %v1165
        %v1181 = vmul.f32 %v1157, %v1169
        %v1182 = vmul.f32 %v1158, %v1173
        %v1183 = vsel %vm334, %v1175, 0.0
        %v1184 = vsel %vm334, %v1176, 0.0
        %v1185 = vadd.f32 %v1183, %v1184
        %v1186 = vsel %vm334, %v1177, 0.0
        %v1187 = vadd.f32 %v1185, %v1186
        %v1188 = vsel %vm334, %v1178, 0.0
        %v1189 = vadd.f32 %v1187, %v1188
        %v1190 = vrot.slane %v1189, 4
        %v1191 = vadd.f32 %v1189, %v1190
        %v1192 = vrot.slane %v1191, 2
        %v1193 = vadd.f32 %v1191, %v1192
        %v1194 = vrot.slane %v1193, 1
        %v1195 = vadd.f32 %v1193, %v1194
        %v1196 = vsel %vm334, %v1179, 0.0
        %v1197 = vsel %vm334, %v1180, 0.0
        %v1198 = vadd.f32 %v1196, %v1197
        %v1199 = vsel %vm334, %v1181, 0.0
        %v1200 = vadd.f32 %v1198, %v1199
        %v1201 = vsel %vm334, %v1182, 0.0
        %v1202 = vadd.f32 %v1200, %v1201
        %v1203 = vrot.slane %v1202, 4
        %v1204 = vadd.f32 %v1202, %v1203
        %v1205 = vrot.slane %v1204, 2
        %v1206 = vadd.f32 %v1204, %v1205
        %v1207 = vrot.slane %v1206, 1
        %v1208 = vadd.f32 %v1206, %v1207
        %s1210 = vtos %v320
        %v1211 = vstv %s1210
        %v1213 = vadd.f32 %v1195, %v1211
        %v1214 = vadd.f32 %v1208, %v1211
        %v1217 = vsel %vm661, %v1214, %v1213
        %vm1219 = vcmask 254976
        %v1220 = vsel %vm1219, %v1217, -inf
        %1221 = vmax.xlane.f32.xlu0 %v1220
        %v1222 = vpop.xlane.xlu0 %1221
        %v1224 = vrot.slane %v1222, 1
        %v1227 = vsub.f32 %v1213, %v1222
        %v1228 = vsub.f32 %v1214, %v1224
        %v1229 = vmul.f32 %v1227, 1.442695
        %v1230 = vpow.pop %v1229
        %v1231 = vmul.f32 %v1228, 1.442695
        %v1232 = vpow.pop %v1231
        %v1235 = vrot.slane %v1232, 7
        %v1236 = vsel %vm661, %v1235, %v1230
        %v1238 = vsel %vm1219, %v1236, 0.0
        %1239 = vadd.xlane.f32.xlu0 %v1238
        %v1240 = vpop.xlane.xlu0 %1239
        %v1241 = vrcp.pop %v1240
        %v1242 = vmul.f32 %v1240, %v1241
        %v1243 = vsub.f32 1.0, %v1242
        %v1244 = vmul.f32 %v1241, %v1243
        %v1245 = vadd.f32 %v1241, %v1244
        %vm1246 = vweird.f32 %v1240
        %vm1247 = vweird.f32 %v1241
        %vm1248 = vmor %vm1246, %vm1247
        %v1249 = vsel %vm1248, %v1241, %v1245
        %v1250 = vand.u32 2147483647, %v1240
        %vm1251 = vcmp.eq.f32.partialorder %v1250, 8.507059e+37
        %v1252 = vand.u32 %v1240, 2147483648
        %v1253 = vor.u32 1.1754944e-38, %v1252
        %v1254 = vsel %vm1251, %v1253, %v1249
        %v1255 = vmul.f32 1.0, %v1254
        %v1257 = vrot.slane %v1255, 1
        %v1260 = vmul.f32 %v1230, %v1255
        %v1261 = vmul.f32 %v1232, %v1257
        %v1262 = vperm.slane %v1260, 0
        %v1263 = vperm.slane %v1261, 0
        %v1264 = vmul.f32 %v1262, %v299
        %v1265 = vmul.f32 %v1262, %v300
        %v1266 = vmul.f32 %v1262, %v301
        %v1267 = vmul.f32 %v1262, %v302
        %v1268 = vmul.f32 %v1262, %v303
        %v1269 = vmul.f32 %v1262, %v304
        %v1270 = vmul.f32 %v1262, %v305
        %v1271 = vmul.f32 %v1262, %v306
        %v1272 = vmul.f32 %v1263, %v307
        %v1273 = vmul.f32 %v1263, %v308
        %v1274 = vmul.f32 %v1263, %v309
        %v1275 = vmul.f32 %v1263, %v310
        %v1276 = vmul.f32 %v1263, %v311
        %v1277 = vmul.f32 %v1263, %v312
        %v1278 = vmul.f32 %v1263, %v313
        %v1279 = vmul.f32 %v1263, %v314
        %v1280 = vsel %vm334, %v1264, 0.0
        %1281 = vadd.xlane.f32.xlu0 %v1280
        %v1282 = vpop.xlane.xlu0 %1281
        %v1283 = vsel %vm334, %v1265, 0.0
        %1284 = vadd.xlane.f32.xlu0 %v1283
        %v1285 = vpop.xlane.xlu0 %1284
        %v1286 = vsel %vm334, %v1266, 0.0
        %1287 = vadd.xlane.f32.xlu0 %v1286
        %v1288 = vpop.xlane.xlu0 %1287
        %v1289 = vsel %vm334, %v1267, 0.0
        %1290 = vadd.xlane.f32.xlu0 %v1289
        %v1291 = vpop.xlane.xlu0 %1290
        %v1292 = vsel %vm334, %v1268, 0.0
        %1293 = vadd.xlane.f32.xlu0 %v1292
        %v1294 = vpop.xlane.xlu0 %1293
        %v1295 = vsel %vm334, %v1269, 0.0
        %1296 = vadd.xlane.f32.xlu0 %v1295
        %v1297 = vpop.xlane.xlu0 %1296
        %v1298 = vsel %vm334, %v1270, 0.0
        %1299 = vadd.xlane.f32.xlu0 %v1298
        %v1300 = vpop.xlane.xlu0 %1299
        %v1301 = vsel %vm334, %v1271, 0.0
        %1302 = vadd.xlane.f32.xlu0 %v1301
        %v1303 = vpop.xlane.xlu0 %1302
        %v1304 = vsel %vm334, %v1272, 0.0
        %1305 = vadd.xlane.f32.xlu0 %v1304
        %v1306 = vpop.xlane.xlu0 %1305
        %v1307 = vsel %vm334, %v1273, 0.0
        %1308 = vadd.xlane.f32.xlu0 %v1307
        %v1309 = vpop.xlane.xlu0 %1308
        %v1310 = vsel %vm334, %v1274, 0.0
        %1311 = vadd.xlane.f32.xlu0 %v1310
        %v1312 = vpop.xlane.xlu0 %1311
        %v1313 = vsel %vm334, %v1275, 0.0
        %1314 = vadd.xlane.f32.xlu0 %v1313
        %v1315 = vpop.xlane.xlu0 %1314
        %v1316 = vsel %vm334, %v1276, 0.0
        %1317 = vadd.xlane.f32.xlu0 %v1316
        %v1318 = vpop.xlane.xlu0 %1317
        %v1319 = vsel %vm334, %v1277, 0.0
        %1320 = vadd.xlane.f32.xlu0 %v1319
        %v1321 = vpop.xlane.xlu0 %1320
        %v1322 = vsel %vm334, %v1278, 0.0
        %1323 = vadd.xlane.f32.xlu0 %v1322
        %v1324 = vpop.xlane.xlu0 %1323
        %v1325 = vsel %vm334, %v1279, 0.0
        %1326 = vadd.xlane.f32.xlu0 %v1325
        %v1327 = vpop.xlane.xlu0 %1326
        %v1330 = vsel %vm661, %v993, %v972
        %v1348 = vperm.slane %v1282, %v630
        %v1349 = vperm.slane %v1285, %v634
        %v1350 = vsel %vm636, %v1349, %v1348
        %v1351 = vperm.slane %v1288, %v638
        %v1352 = vsel %vm640, %v1351, %v1350
        %v1353 = vperm.slane %v1291, %v642
        %v1354 = vsel %vm644, %v1353, %v1352
        %v1355 = vadd.s32 %v616, 4294967232
        %v1356 = vperm.slane %v1294, %v1355
        %vm1357 = vcmask 589312
        %v1358 = vsel %vm1357, %v1356, %v1354
        %v1359 = vadd.s32 %v616, 4294967224
        %v1360 = vperm.slane %v1297, %v1359
        %vm1361 = vcmask 654912
        %v1362 = vsel %vm1361, %v1360, %v1358
        %v1363 = vadd.s32 %v616, 4294967216
        %v1364 = vperm.slane %v1300, %v1363
        %vm1365 = vcmask 720512
        %v1366 = vsel %vm1365, %v1364, %v1362
        %v1367 = vadd.s32 %v616, 4294967208
        %v1368 = vperm.slane %v1303, %v1367
        %vm1369 = vcmask 786112
        %v1370 = vsel %vm1369, %v1368, %v1366
        %v1371 = vperm.slane %v1306, %v630
        %v1372 = vperm.slane %v1309, %v634
        %v1373 = vsel %vm636, %v1372, %v1371
        %v1374 = vperm.slane %v1312, %v638
        %v1375 = vsel %vm640, %v1374, %v1373
        %v1376 = vperm.slane %v1315, %v642
        %v1377 = vsel %vm644, %v1376, %v1375
        %v1378 = vperm.slane %v1318, %v1355
        %v1379 = vsel %vm1357, %v1378, %v1377
        %v1380 = vperm.slane %v1321, %v1359
        %v1381 = vsel %vm1361, %v1380, %v1379
        %v1382 = vperm.slane %v1324, %v1363
        %v1383 = vsel %vm1365, %v1382, %v1381
        %v1384 = vperm.slane %v1327, %v1367
        %v1385 = vsel %vm1369, %v1384, %v1383
        %v1386 = vsel %vm661, %v1385, %v1370
        %v1388 = vadd.s32 %v616, 4294967200
        %v1389 = vperm.slane %v859, %v1388
        %v1390 = vadd.s32 %v616, 4294967192
        %v1391 = vperm.slane %v864, %v1390
        %vm1392 = vcmask 917312
        %v1393 = vsel %vm1392, %v1391, %v1389
        %v1394 = vadd.s32 %v616, 4294967184
        %v1395 = vperm.slane %v869, %v1394
        %vm1396 = vcmask 982912
        %v1397 = vsel %vm1396, %v1395, %v1393
        %v1398 = vadd.s32 %v616, 4294967176
        %v1399 = vperm.slane %v874, %v1398
        %vm1400 = vcmask 1048512
        %v1401 = vsel %vm1400, %v1399, %v1397
        %v1402 = vperm.slane %v879, %v616
        %v1403 = vperm.slane %v884, %v618
        %v1404 = vsel %vm620, %v1403, %v1402
        %v1405 = vperm.slane %v889, %v622
        %v1406 = vsel %vm624, %v1405, %v1404
        %v1407 = vperm.slane %v894, %v626
        %v1408 = vsel %vm628, %v1407, %v1406
        %v1409 = vperm.slane %v899, %v1388
        %v1410 = vperm.slane %v904, %v1390
        %v1411 = vsel %vm1392, %v1410, %v1409
        %v1412 = vperm.slane %v909, %v1394
        %v1413 = vsel %vm1396, %v1412, %v1411
        %v1414 = vperm.slane %v914, %v1398
        %v1415 = vsel %vm1400, %v1414, %v1413
        %v1416 = vperm.slane %v919, %v616
        %v1417 = vperm.slane %v924, %v618
        %v1418 = vsel %vm620, %v1417, %v1416
        %v1419 = vperm.slane %v929, %v622
        %v1420 = vsel %vm624, %v1419, %v1418
        %v1421 = vperm.slane %v934, %v626
        %v1422 = vsel %vm628, %v1421, %v1420
        %v1423 = vsel %vm661, %v1415, %v1401
        %v1424 = vsel %vm661, %v1422, %v1408
        %v1427 = vsel %vm334, %v1330, %v1386
        %vm1428 = vcmask 785408
        %v1429 = vsel %vm1428, %v1427, %v1423
        %v1430 = vsel %vm334, %v1424, 0.0
        %v1433 = vrot.slane %v1430, 6
        %vm1434 = vcmask 1041408
        %v1435 = vsel %vm1434, %v1429, %v1433
        %1437 = vst [vmem:[%s287] sm:$0xf] %v1435
        %s1438 = sand.u32 %s186, 1
        %s1439 = scalar_lea.sflag [#allocation3], %s1438
        %s1440 = sand.u32 %s186, 1
        %s1441 = smul.addr %s1440, 4
        %s1442 = scalar_lea.vmem [#allocation2], %s1441
        // Predicated region
        $region49: #{tpu_custom_call.1} parent=47 // pred_check
          %p1443 = pneg %p196
        $region50: #{tpu_custom_call.1} parent=47 // pred_check_branch
          %1445 = sbr.rel (%p1443) target = $region52
        $region51: #{tpu_custom_call.1} parent=47 // pred_region
          %1447 = vsyncadd %s1439, 0
          %s1448 = smul.addr %s21, 2
          %s1449 = smul.addr %s1448, 2
          %s1450 = scalar_lea.hbm %s7, %s1449
          %s1452 = sshll.u32 %s1442, 4
          %s1453 = int_to_ptr.vmem [resolvable:$true] %s1452
          %s1454 = sshll.u32 %s1450, 4
          %s1455 = int_to_ptr.hbm [resolvable:$true] %s1454
          %1457 = dma.vmem_to_hbm [thread:$0]  %s1453, 64, %s1455, %s1439
        $region52: #{tpu_custom_call.1} parent=47 // pred_fallthru
          _
      $region48: #{tpu_custom_call.1} parent=5 // pred_fallthru
        _
      %p1458 = scmp.le.s32.totalorder 2, %s16
      // Predicated region
      $region53: #{tpu_custom_call.1} parent=5 // pred_check
        %p1459 = pneg %p1458
      $region54: #{tpu_custom_call.1} parent=5 // pred_check_branch
        %1461 = sbr.rel (%p1459) target = $region56
      $region55: #{tpu_custom_call.1} parent=5 // pred_region
        %s1462 = ssub.s32 %s16, 2
        // Predicated region
        $region57: #{tpu_custom_call.1} parent=55 // pred_check
          %p1463 = pneg %p202
        $region58: #{tpu_custom_call.1} parent=55 // pred_check_branch
          %1465 = sbr.rel (%p1463) target = $region60
        $region59: #{tpu_custom_call.1} parent=55 // pred_region
          %s1466 = sand.u32 %s187, 1
          %s1467 = scalar_lea.sflag [#allocation3], %s1466
          %s1468 = sand.u32 %s187, 1
          %s1469 = smul.addr %s1468, 4
          %s1470 = scalar_lea.vmem [#allocation2], %s1469
          %1472 = dma.done %s1467, 64
        $region60: #{tpu_custom_call.1} parent=55 // pred_fallthru
          _
      $region56: #{tpu_custom_call.1} parent=5 // pred_fallthru
        _
    $region6: #{tpu_custom_call.1} parent=1 // loop_footer
      %s20 = sadd.s32 1, %s16
    $region7: #{tpu_custom_call.1} parent=1 // loop_footer_branch
      %15 = sbr.rel target = $region3
    $region8: #{tpu_custom_call.1} parent=1 // loop_exit
      _
    %1473 = vsyncpa [#allocation3], 1
    %s1474 = scalar_lea.sflag [#allocation3], 1
    %1475 = vsyncpa %s1474, 1

</llo_original>
